<compile_context>
chip_gen: v5e
topology: v5e:2x2
jax: 0.10.0
libtpu: 0.0.40
codegen_flags: <defaults>
</compile_context>

<pallas_src>
import functools

import jax
import jax.numpy as jnp
from jax.experimental import pallas as pl
from jax.experimental.pallas import tpu as pltpu


def _round_up(x, m):
    return (x + m - 1) // m * m


# ----------------------------------------------------------------------------
# Pallas kernel: fused conv (9 tap-shifted MXU matmuls) + retain + edit
# ----------------------------------------------------------------------------
def _instrumented_conv_kernel(x_ref,          # VMEM (C_in_pad, L_pad + 2*slack) padded flattened input
                              w_ref,          # VMEM (kH*kW, C_out, C_in_pad)    per-tap conv weights
                              aux_ref,        # VMEM (C_out, 4) cols: bias, ablation, replacement, offset
                              retained_ref,   # VMEM (C_out, L_pad) retained (pre-edit) conv output
                              edited_ref,     # VMEM (C_out, L_pad) edited output
                              *, n_taps, kw_dim, pad_h, pad_w, wp, slack, out_len):
    # --- wrapped layer forward: 3x3 conv as 9 tap-shifted matmuls over C_in --
    acc = jnp.zeros(retained_ref.shape, jnp.float32)
    for t in range(n_taps):                       # unrolled: static offsets
        di, dj = t // kw_dim, t % kw_dim
        off = (di - pad_h) * wp + (dj - pad_w)    # shift in flattened padded space
        start = slack + off                       # static python int >= 0
        shifted = x_ref[:, pl.ds(start, out_len)]            # (C_in_pad, L_pad)
        acc = acc + jnp.dot(w_ref[t], shifted,                # (C_out,C_in_pad)x(C_in_pad,L_pad)
                            preferred_element_type=jnp.float32)
    conv = acc + aux_ref[:, 0:1]                  # + bias, broadcast over lanes

    # --- retain_layer: self._retained[aka] = x.detach() ----------------------
    retained_ref[...] = conv

    # --- edit_layer: x * (1 - a) + r * a + offset  (per-channel broadcast) ---
    a = aux_ref[:, 1:2]
    r = aux_ref[:, 2:3]
    b_off = aux_ref[:, 3:4]
    edited_ref[...] = conv * (1.0 - a) + r * a + b_off


@jax.jit
def instrumented_conv_forward(x_nchw, weight, bias, ablation, replacement, offset):
    """Runs the hooked Conv2d forward; returns (edited_output, retained) in NCHW."""
    N, C_in, H, W = x_nchw.shape
    C_out, _, kH, kW = weight.shape
    pad_h, pad_w = kH // 2, kW // 2
    Hp, Wp = H + 2 * pad_h, W + 2 * pad_w
    L = N * Hp * Wp                               # flattened padded spatial length
    L_pad = _round_up(L, 128)                     # lane-dense output width
    C_in_pad = _round_up(C_in, 8)                 # full sublane group
    slack = pad_h * Wp + pad_w                    # max |tap offset|

    # ---- glue: channels-first, flattened, zero-slacked, lane-padded input ----
    xp = jnp.pad(x_nchw, ((0, 0), (0, 0), (pad_h, pad_h), (pad_w, pad_w)))
    xflat = xp.transpose(1, 0, 2, 3).reshape(C_in, L).astype(jnp.float32)
    xbig = jnp.pad(xflat, ((0, C_in_pad - C_in),
                           (slack, slack + (L_pad - L))))     # (C_in_pad, L_pad + 2*slack)

    # per-tap weights: w_taps[di*kW+dj, co, ci] = weight[co, ci, di, dj], ci padded
    w_taps = weight.transpose(2, 3, 0, 1).reshape(kH * kW, C_out, C_in).astype(jnp.float32)
    w_taps = jnp.pad(w_taps, ((0, 0), (0, 0), (0, C_in_pad - C_in)))

    # pack bias / ablation / replacement / offset into one (C_out, 4) input.
    # ablation/replacement/offset may be scalars or per-channel (C_out,) vectors.
    # TODO(synk): full-rank spatial ablation masks (shape matching x) are not supported here.
    a_row = jnp.broadcast_to(jnp.asarray(ablation, jnp.float32).reshape(-1), (C_out,))
    r_row = jnp.broadcast_to(jnp.asarray(replacement, jnp.float32).reshape(-1), (C_out,))
    b_row = jnp.broadcast_to(jnp.asarray(offset, jnp.float32).reshape(-1), (C_out,))
    aux = jnp.stack([bias.astype(jnp.float32), a_row, r_row, b_row], axis=1)   # (C_out, 4)

    kernel = functools.partial(
        _instrumented_conv_kernel,
        n_taps=kH * kW, kw_dim=kW, pad_h=pad_h, pad_w=pad_w,
        wp=Wp, slack=slack, out_len=L_pad)

    retained_cl, edited_cl = pl.pallas_call(
        kernel,
        out_shape=(jax.ShapeDtypeStruct((C_out, L_pad), jnp.float32),   # retained
                   jax.ShapeDtypeStruct((C_out, L_pad), jnp.float32)),  # edited
        in_specs=[
            pl.BlockSpec(memory_space=pltpu.MemorySpace.VMEM),      # xbig
            pl.BlockSpec(memory_space=pltpu.MemorySpace.VMEM),      # w_taps
            pl.BlockSpec(memory_space=pltpu.MemorySpace.VMEM),      # aux params
        ],
        out_specs=(
            pl.BlockSpec(memory_space=pltpu.MemorySpace.VMEM),
            pl.BlockSpec(memory_space=pltpu.MemorySpace.VMEM),
        ),
    )(xbig, w_taps, aux)

    # glue: drop lane padding, crop padded spatial positions, (C_out,N,H,W) -> NCHW
    def to_nchw(flat):
        full = flat[:, :L].reshape(C_out, N, Hp, Wp)
        return full[:, :, pad_h:pad_h + H, pad_w:pad_w + W].transpose(1, 0, 2, 3)

    return to_nchw(edited_cl), to_nchw(retained_cl)


# ----------------------------------------------------------------------------
# Thin python wrapper mirroring the InstrumentedModel API (retain + edit)
# ----------------------------------------------------------------------------
class InstrumentedConvModel:
    """Synthetic InstrumentedModel(model=Conv2d(4,8,3,pad=1)) with one hooked layer."""

    def __init__(self, weight, bias):
        self.weight = weight
        self.bias = bias
        self._retained = {}
        self._ablation = {}
        self._replacement = {}
        self._offset = {}
        self._layer = "conv3"

    def retain_layer(self, layername):
        self._retained[layername] = None

    def edit_layer(self, layername, ablation=None, replacement=None, offset=None):
        if ablation is None and replacement is not None:
            ablation = 1.0
        if ablation is not None:
            self._ablation[layername] = ablation
        if replacement is not None:
            self._replacement[layername] = replacement
        if offset is not None:
            self._offset[layername] = offset

    def retained_layer(self, aka=None):
        if aka is None:
            aka = next(iter(self._retained))
        return self._retained[aka]

    def __call__(self, x):
        aka = self._layer
        C_out = self.weight.shape[0]
        a = self._ablation.get(aka, 0.0)
        r = self._replacement.get(aka, jnp.zeros((C_out,), jnp.float32))
        b = self._offset.get(aka, jnp.zeros((C_out,), jnp.float32))
        edited, retained = instrumented_conv_forward(
            x, self.weight, self.bias, a, r, b)
        if aka in self._retained:
            self._retained[aka] = retained
        return edited


# ----------------------------------------------------------------------------
if __name__ == "__main__":
    key = jax.random.PRNGKey(0)
    kx, kw, kb, kr, ko = jax.random.split(key, 5)

    N, C_in, H, W = 2, 4, 16, 16
    C_out, kH, kW = 8, 3, 3

    x = jax.random.normal(kx, (N, C_in, H, W), dtype=jnp.float32)
    weight = jax.random.normal(kw, (C_out, C_in, kH, kW), dtype=jnp.float32) * 0.1
    bias = jax.random.normal(kb, (C_out,), dtype=jnp.float32) * 0.1
    replacement = jax.random.normal(kr, (C_out,), dtype=jnp.float32)
    offset = jax.random.normal(ko, (C_out,), dtype=jnp.float32) * 0.5
    ablation = 0.5

    inst = InstrumentedConvModel(weight, bias)
    inst.retain_layer("conv3")
    inst.edit_layer("conv3", ablation=ablation, replacement=replacement, offset=offset)

    edited = inst(x)
    retained = inst.retained_layer("conv3")
    jax.block_until_ready((edited, retained))

    # reference check in plain JAX (conv + edit semantics of _postprocess_forward)
    conv_ref = jax.lax.conv_general_dilated(
        x, weight, window_strides=(1, 1), padding="SAME",
        dimension_numbers=("NCHW", "OIHW", "NCHW")) + bias.reshape(1, C_out, 1, 1)
    r4 = replacement.reshape(1, C_out, 1, 1)
    b4 = offset.reshape(1, C_out, 1, 1)
    edited_ref = conv_ref * (1.0 - ablation) + r4 * ablation + b4

    assert edited.shape == (N, C_out, H, W)
    assert retained.shape == (N, C_out, H, W)
    assert jnp.allclose(retained, conv_ref, atol=1e-4, rtol=1e-4)
    assert jnp.allclose(edited, edited_ref, atol=1e-4, rtol=1e-4)

    print("KERNEL_OK")
</pallas_src>

<mosaic_0001>
module attributes {stable_mosaic.version = 11 : i64} {
  func.func @_instrumented_conv_kernel(%arg0: memref<8x806xf32, #tpu.memory_space<vmem>>, %arg1: memref<9x8x8xf32, #tpu.memory_space<vmem>>, %arg2: memref<8x4xf32, #tpu.memory_space<vmem>>, %arg3: memref<8x768xf32, #tpu.memory_space<vmem>>, %arg4: memref<8x768xf32, #tpu.memory_space<vmem>>) attributes {dimension_semantics = [], scalar_prefetch = 0 : i64, scratch_operands = 0 : i64, tpu.core_type = #tpu.core_type<tc>} {
    %cst = arith.constant 0.000000e+00 : f32
    %0 = vector.broadcast %cst : f32 to vector<8x768xf32>
    %c0 = arith.constant 0 : index
    %c0_0 = arith.constant 0 : index
    %1 = vector.load %arg0[%c0, %c0_0] : memref<8x806xf32, #tpu.memory_space<vmem>>, vector<8x768xf32>
    %c0_1 = arith.constant 0 : index
    %c0_2 = arith.constant 0 : index
    %c0_3 = arith.constant 0 : index
    %2 = vector.load %arg1[%c0_1, %c0_2, %c0_3] : memref<9x8x8xf32, #tpu.memory_space<vmem>>, vector<1x8x8xf32>
    %3 = vector.shape_cast %2 : vector<1x8x8xf32> to vector<8x8xf32>
    %cst_4 = arith.constant dense<0.000000e+00> : vector<8x768xf32>
    %4 = tpu.matmul %3, %1, %cst_4 {dimension_numbers = #tpu.dot_dimension_numbers<[1], [0], [0], [1], [0, 0, 1, 1], [], []>} : vector<8x8xf32>, vector<8x768xf32>, vector<8x768xf32> -> vector<8x768xf32>
    %5 = arith.addf %0, %4 : vector<8x768xf32>
    %c0_5 = arith.constant 0 : index
    %c1 = arith.constant 1 : index
    %6 = vector.load %arg0[%c0_5, %c1] : memref<8x806xf32, #tpu.memory_space<vmem>>, vector<8x768xf32>
    %c1_6 = arith.constant 1 : index
    %c0_7 = arith.constant 0 : index
    %c0_8 = arith.constant 0 : index
    %7 = vector.load %arg1[%c1_6, %c0_7, %c0_8] : memref<9x8x8xf32, #tpu.memory_space<vmem>>, vector<1x8x8xf32>
    %8 = vector.shape_cast %7 : vector<1x8x8xf32> to vector<8x8xf32>
    %cst_9 = arith.constant dense<0.000000e+00> : vector<8x768xf32>
    %9 = tpu.matmul %8, %6, %cst_9 {dimension_numbers = #tpu.dot_dimension_numbers<[1], [0], [0], [1], [0, 0, 1, 1], [], []>} : vector<8x8xf32>, vector<8x768xf32>, vector<8x768xf32> -> vector<8x768xf32>
    %10 = arith.addf %5, %9 : vector<8x768xf32>
    %c0_10 = arith.constant 0 : index
    %c2 = arith.constant 2 : index
    %11 = vector.load %arg0[%c0_10, %c2] : memref<8x806xf32, #tpu.memory_space<vmem>>, vector<8x768xf32>
    %c2_11 = arith.constant 2 : index
    %c0_12 = arith.constant 0 : index
    %c0_13 = arith.constant 0 : index
    %12 = vector.load %arg1[%c2_11, %c0_12, %c0_13] : memref<9x8x8xf32, #tpu.memory_space<vmem>>, vector<1x8x8xf32>
    %13 = vector.shape_cast %12 : vector<1x8x8xf32> to vector<8x8xf32>
    %cst_14 = arith.constant dense<0.000000e+00> : vector<8x768xf32>
    %14 = tpu.matmul %13, %11, %cst_14 {dimension_numbers = #tpu.dot_dimension_numbers<[1], [0], [0], [1], [0, 0, 1, 1], [], []>} : vector<8x8xf32>, vector<8x768xf32>, vector<8x768xf32> -> vector<8x768xf32>
    %15 = arith.addf %10, %14 : vector<8x768xf32>
    %c0_15 = arith.constant 0 : index
    %c18 = arith.constant 18 : index
    %16 = vector.load %arg0[%c0_15, %c18] : memref<8x806xf32, #tpu.memory_space<vmem>>, vector<8x768xf32>
    %c3 = arith.constant 3 : index
    %c0_16 = arith.constant 0 : index
    %c0_17 = arith.constant 0 : index
    %17 = vector.load %arg1[%c3, %c0_16, %c0_17] : memref<9x8x8xf32, #tpu.memory_space<vmem>>, vector<1x8x8xf32>
    %18 = vector.shape_cast %17 : vector<1x8x8xf32> to vector<8x8xf32>
    %cst_18 = arith.constant dense<0.000000e+00> : vector<8x768xf32>
    %19 = tpu.matmul %18, %16, %cst_18 {dimension_numbers = #tpu.dot_dimension_numbers<[1], [0], [0], [1], [0, 0, 1, 1], [], []>} : vector<8x8xf32>, vector<8x768xf32>, vector<8x768xf32> -> vector<8x768xf32>
    %20 = arith.addf %15, %19 : vector<8x768xf32>
    %c0_19 = arith.constant 0 : index
    %c19 = arith.constant 19 : index
    %21 = vector.load %arg0[%c0_19, %c19] : memref<8x806xf32, #tpu.memory_space<vmem>>, vector<8x768xf32>
    %c4 = arith.constant 4 : index
    %c0_20 = arith.constant 0 : index
    %c0_21 = arith.constant 0 : index
    %22 = vector.load %arg1[%c4, %c0_20, %c0_21] : memref<9x8x8xf32, #tpu.memory_space<vmem>>, vector<1x8x8xf32>
    %23 = vector.shape_cast %22 : vector<1x8x8xf32> to vector<8x8xf32>
    %cst_22 = arith.constant dense<0.000000e+00> : vector<8x768xf32>
    %24 = tpu.matmul %23, %21, %cst_22 {dimension_numbers = #tpu.dot_dimension_numbers<[1], [0], [0], [1], [0, 0, 1, 1], [], []>} : vector<8x8xf32>, vector<8x768xf32>, vector<8x768xf32> -> vector<8x768xf32>
    %25 = arith.addf %20, %24 : vector<8x768xf32>
    %c0_23 = arith.constant 0 : index
    %c20 = arith.constant 20 : index
    %26 = vector.load %arg0[%c0_23, %c20] : memref<8x806xf32, #tpu.memory_space<vmem>>, vector<8x768xf32>
    %c5 = arith.constant 5 : index
    %c0_24 = arith.constant 0 : index
    %c0_25 = arith.constant 0 : index
    %27 = vector.load %arg1[%c5, %c0_24, %c0_25] : memref<9x8x8xf32, #tpu.memory_space<vmem>>, vector<1x8x8xf32>
    %28 = vector.shape_cast %27 : vector<1x8x8xf32> to vector<8x8xf32>
    %cst_26 = arith.constant dense<0.000000e+00> : vector<8x768xf32>
    %29 = tpu.matmul %28, %26, %cst_26 {dimension_numbers = #tpu.dot_dimension_numbers<[1], [0], [0], [1], [0, 0, 1, 1], [], []>} : vector<8x8xf32>, vector<8x768xf32>, vector<8x768xf32> -> vector<8x768xf32>
    %30 = arith.addf %25, %29 : vector<8x768xf32>
    %c0_27 = arith.constant 0 : index
    %c36 = arith.constant 36 : index
    %31 = vector.load %arg0[%c0_27, %c36] : memref<8x806xf32, #tpu.memory_space<vmem>>, vector<8x768xf32>
    %c6 = arith.constant 6 : index
    %c0_28 = arith.constant 0 : index
    %c0_29 = arith.constant 0 : index
    %32 = vector.load %arg1[%c6, %c0_28, %c0_29] : memref<9x8x8xf32, #tpu.memory_space<vmem>>, vector<1x8x8xf32>
    %33 = vector.shape_cast %32 : vector<1x8x8xf32> to vector<8x8xf32>
    %cst_30 = arith.constant dense<0.000000e+00> : vector<8x768xf32>
    %34 = tpu.matmul %33, %31, %cst_30 {dimension_numbers = #tpu.dot_dimension_numbers<[1], [0], [0], [1], [0, 0, 1, 1], [], []>} : vector<8x8xf32>, vector<8x768xf32>, vector<8x768xf32> -> vector<8x768xf32>
    %35 = arith.addf %30, %34 : vector<8x768xf32>
    %c0_31 = arith.constant 0 : index
    %c37 = arith.constant 37 : index
    %36 = vector.load %arg0[%c0_31, %c37] : memref<8x806xf32, #tpu.memory_space<vmem>>, vector<8x768xf32>
    %c7 = arith.constant 7 : index
    %c0_32 = arith.constant 0 : index
    %c0_33 = arith.constant 0 : index
    %37 = vector.load %arg1[%c7, %c0_32, %c0_33] : memref<9x8x8xf32, #tpu.memory_space<vmem>>, vector<1x8x8xf32>
    %38 = vector.shape_cast %37 : vector<1x8x8xf32> to vector<8x8xf32>
    %cst_34 = arith.constant dense<0.000000e+00> : vector<8x768xf32>
    %39 = tpu.matmul %38, %36, %cst_34 {dimension_numbers = #tpu.dot_dimension_numbers<[1], [0], [0], [1], [0, 0, 1, 1], [], []>} : vector<8x8xf32>, vector<8x768xf32>, vector<8x768xf32> -> vector<8x768xf32>
    %40 = arith.addf %35, %39 : vector<8x768xf32>
    %c0_35 = arith.constant 0 : index
    %c38 = arith.constant 38 : index
    %41 = vector.load %arg0[%c0_35, %c38] : memref<8x806xf32, #tpu.memory_space<vmem>>, vector<8x768xf32>
    %c8 = arith.constant 8 : index
    %c0_36 = arith.constant 0 : index
    %c0_37 = arith.constant 0 : index
    %42 = vector.load %arg1[%c8, %c0_36, %c0_37] : memref<9x8x8xf32, #tpu.memory_space<vmem>>, vector<1x8x8xf32>
    %43 = vector.shape_cast %42 : vector<1x8x8xf32> to vector<8x8xf32>
    %cst_38 = arith.constant dense<0.000000e+00> : vector<8x768xf32>
    %44 = tpu.matmul %43, %41, %cst_38 {dimension_numbers = #tpu.dot_dimension_numbers<[1], [0], [0], [1], [0, 0, 1, 1], [], []>} : vector<8x8xf32>, vector<8x768xf32>, vector<8x768xf32> -> vector<8x768xf32>
    %45 = arith.addf %40, %44 : vector<8x768xf32>
    %c0_39 = arith.constant 0 : index
    %c0_40 = arith.constant 0 : index
    %46 = vector.load %arg2[%c0_39, %c0_40] : memref<8x4xf32, #tpu.memory_space<vmem>>, vector<8x1xf32>
    %47 = vector.broadcast %46 : vector<8x1xf32> to vector<8x768xf32>
    %48 = arith.addf %45, %47 : vector<8x768xf32>
    %c0_41 = arith.constant 0 : index
    %c0_42 = arith.constant 0 : index
    %49 = vector.load %arg3[%c0_41, %c0_42] : memref<8x768xf32, #tpu.memory_space<vmem>>, vector<8x768xf32>
    tpu.vector_store %arg3[%c0_41, %c0_42], %48 {strides = array<i32>} : memref<8x768xf32, #tpu.memory_space<vmem>>, vector<8x768xf32>,
    %c0_43 = arith.constant 0 : index
    %c1_44 = arith.constant 1 : index
    %50 = vector.load %arg2[%c0_43, %c1_44] : memref<8x4xf32, #tpu.memory_space<vmem>>, vector<8x1xf32>
    %c0_45 = arith.constant 0 : index
    %c2_46 = arith.constant 2 : index
    %51 = vector.load %arg2[%c0_45, %c2_46] : memref<8x4xf32, #tpu.memory_space<vmem>>, vector<8x1xf32>
    %c0_47 = arith.constant 0 : index
    %c3_48 = arith.constant 3 : index
    %52 = vector.load %arg2[%c0_47, %c3_48] : memref<8x4xf32, #tpu.memory_space<vmem>>, vector<8x1xf32>
    %cst_49 = arith.constant 1.000000e+00 : f32
    %53 = vector.broadcast %cst_49 : f32 to vector<8x1xf32>
    %54 = arith.subf %53, %50 : vector<8x1xf32>
    %55 = vector.broadcast %54 : vector<8x1xf32> to vector<8x768xf32>
    %56 = arith.mulf %48, %55 : vector<8x768xf32>
    %57 = arith.mulf %51, %50 : vector<8x1xf32>
    %58 = vector.broadcast %57 : vector<8x1xf32> to vector<8x768xf32>
    %59 = arith.addf %56, %58 : vector<8x768xf32>
    %60 = vector.broadcast %52 : vector<8x1xf32> to vector<8x768xf32>
    %61 = arith.addf %59, %60 : vector<8x768xf32>
    %c0_50 = arith.constant 0 : index
    %c0_51 = arith.constant 0 : index
    %62 = vector.load %arg4[%c0_50, %c0_51] : memref<8x768xf32, #tpu.memory_space<vmem>>, vector<8x768xf32>
    tpu.vector_store %arg4[%c0_50, %c0_51], %61 {strides = array<i32>} : memref<8x768xf32, #tpu.memory_space<vmem>>, vector<8x768xf32>,
    return
  }
}

</mosaic_0001>

<llo_original>
// kernel: instrumented_conv_forward.1
$region0: #{instrumented_conv_forward.1}
  #allocation0 [shape = 'u32[]', space=smem, size = 0x4, offset = 0x4, fixed_abs, tag = 'smem constant byte address 0x4 - core index']
  #allocation1 [shape = 'u32[72,128]{1,0:T(1,128)}', space=vmem, size = 0x9000, scoped, tag = 'internal scratch']
  %s0 = inlined_call_operand.vmem [shape: f32[8,806], index: 0, kind: input, shape index: {}]
  %s1 = inlined_call_operand.vmem [shape: f32[9,8,8], index: 1, kind: input, shape index: {}]
  %s2 = inlined_call_operand.vmem [shape: f32[8,4], index: 2, kind: input, shape index: {}]
  %s3 = inlined_call_operand.vmem [shape: f32[8,768], index: 3, kind: output, shape index: {0}]
  %s4 = inlined_call_operand.vmem [shape: f32[8,768], index: 4, kind: output, shape index: {1}]
  %5 = xla_tuple %s3, %s4
  %s6 = sld [smem:[#allocation0]]
  $region30: #{instrumented_conv_forward.1} parent=0
    _
  %s8 = ssub.s32 1, %s6
  %s9 = scalar_select 0, %s8, %s6
  // Predicated region
  $region2: #{instrumented_conv_forward.1} parent=0 // pred_check
    _
  $region3: #{instrumented_conv_forward.1} parent=0 // pred_check_branch
    %11 = sbr.rel (0) target = $region5
  $region4: #{instrumented_conv_forward.1} parent=0 // pred_region
    _
  $region5: #{instrumented_conv_forward.1} parent=0 // pred_fallthru
    _
  // Predicated region
  $region6: #{instrumented_conv_forward.1} parent=0 // pred_check
    _
  $region7: #{instrumented_conv_forward.1} parent=0 // pred_check_branch
    %13 = sbr.rel (0) target = $region9
  $region8: #{instrumented_conv_forward.1} parent=0 // pred_region
    _
  $region9: #{instrumented_conv_forward.1} parent=0 // pred_fallthru
    _
  // Predicated region
  $region10: #{instrumented_conv_forward.1} parent=0 // pred_check
    _
  $region11: #{instrumented_conv_forward.1} parent=0 // pred_check_branch
    %15 = sbr.rel (0) target = $region13
  $region12: #{instrumented_conv_forward.1} parent=0 // pred_region
    _
  $region13: #{instrumented_conv_forward.1} parent=0 // pred_fallthru
    _
  %v16 = vld [vmem:[%s0] sm:$0xff]
  %v17 = vld [vmem:[%s0 + $0x8] sm:$0xff]
  %v18 = vld [vmem:[%s0 + $0x10] sm:$0xff]
  %v19 = vld [vmem:[%s0 + $0x18] sm:$0xff]
  %v20 = vld [vmem:[%s0 + $0x20] sm:$0xff]
  %v21 = vld [vmem:[%s0 + $0x28] sm:$0xff]
  %v22 = vld [vmem:[%s1] sm:$0xff]
  %v23 = vld [vmem:[%s0 + $0x30] sm:$0xff]
  %s24 = scalar_lea.vmem %s1, 8
  %v25 = vld [vmem:[%s24] sm:$0xff]
  %33 = vrot.lane.b32.xlu0 %v16, 127
  %v34 = vpop.permute.xlu0 %33
  %35 = vrot.lane.b32.xlu0 %v17, 127
  %v36 = vpop.permute.xlu0 %35
  %37 = vrot.lane.b32.xlu0 %v18, 127
  %v38 = vpop.permute.xlu0 %37
  %39 = vrot.lane.b32.xlu0 %v19, 127
  %v40 = vpop.permute.xlu0 %39
  %41 = vrot.lane.b32.xlu0 %v20, 127
  %v42 = vpop.permute.xlu0 %41
  %43 = vrot.lane.b32.xlu0 %v21, 127
  %v44 = vpop.permute.xlu0 %43
  %45 = vrot.lane.b32.xlu0 %v23, 127
  %v46 = vpop.permute.xlu0 %45
  %vm47 = vcmask 1039360
  %v48 = vsel %vm47, %v34, %v36
  %v49 = vsel %vm47, %v36, %v38
  %v50 = vsel %vm47, %v38, %v40
  %v51 = vsel %vm47, %v40, %v42
  %v52 = vsel %vm47, %v42, %v44
  %v53 = vsel %vm47, %v44, %v46
  %vm60 = vcmask 64512
  %v62 = vsel %vm60, %v25, 0
  %64 = vmatpush.msra.mxu0 0.0
  %65 = vmatpush.msra.mxu0 0.0
  %66 = vmatpush.msra.mxu0 0.0
  %67 = vmatpush.msra.mxu0 0.0
  %68 = vmatpush.msra.mxu0 0.0
  %69 = vmatpush.msra.mxu0 0.0
  %70 = vmatpush.msra.mxu0 0.0
  %71 = vmatpush.msra.mxu0 0.0
  %72 = vmatpush.msra.mxu0 0.0
  %73 = vmatpush.msra.mxu0 0.0
  %74 = vmatpush.msra.mxu0 0.0
  %75 = vmatpush.msra.mxu0 0.0
  %76 = vmatpush.msra.mxu0 0.0
  %77 = vmatpush.msra.mxu0 0.0
  %78 = vmatpush.msra.mxu0 0.0
  %79 = vmatpush.msra.mxu0 %v48
  %80 = vmatmul.f32.gmra.mxu0 %v62
  %v81 = vpop.f32.mrf.mxu0
  %v82 = vadd.f32 0.0, %v81
  %83 = vdwg.mxu0
  %84 = vmatpush.msra.mxu0 0.0
  %85 = vmatpush.msra.mxu0 0.0
  %86 = vmatpush.msra.mxu0 0.0
  %87 = vmatpush.msra.mxu0 0.0
  %88 = vmatpush.msra.mxu0 0.0
  %89 = vmatpush.msra.mxu0 0.0
  %90 = vmatpush.msra.mxu0 0.0
  %91 = vmatpush.msra.mxu0 0.0
  %92 = vmatpush.msra.mxu0 0.0
  %93 = vmatpush.msra.mxu0 0.0
  %94 = vmatpush.msra.mxu0 0.0
  %95 = vmatpush.msra.mxu0 0.0
  %96 = vmatpush.msra.mxu0 0.0
  %97 = vmatpush.msra.mxu0 0.0
  %98 = vmatpush.msra.mxu0 0.0
  %99 = vmatpush.msra.mxu0 %v49
  %100 = vmatmul.f32.gmra.mxu0 %v62
  %v101 = vpop.f32.mrf.mxu0
  %v102 = vadd.f32 0.0, %v101
  %103 = vdwg.mxu0
  %104 = vmatpush.msra.mxu0 0.0
  %105 = vmatpush.msra.mxu0 0.0
  %106 = vmatpush.msra.mxu0 0.0
  %107 = vmatpush.msra.mxu0 0.0
  %108 = vmatpush.msra.mxu0 0.0
  %109 = vmatpush.msra.mxu0 0.0
  %110 = vmatpush.msra.mxu0 0.0
  %111 = vmatpush.msra.mxu0 0.0
  %112 = vmatpush.msra.mxu0 0.0
  %113 = vmatpush.msra.mxu0 0.0
  %114 = vmatpush.msra.mxu0 0.0
  %115 = vmatpush.msra.mxu0 0.0
  %116 = vmatpush.msra.mxu0 0.0
  %117 = vmatpush.msra.mxu0 0.0
  %118 = vmatpush.msra.mxu0 0.0
  %119 = vmatpush.msra.mxu0 %v50
  %120 = vmatmul.f32.gmra.mxu0 %v62
  %v121 = vpop.f32.mrf.mxu0
  %v122 = vadd.f32 0.0, %v121
  %123 = vdwg.mxu0
  %124 = vmatpush.msra.mxu0 0.0
  %125 = vmatpush.msra.mxu0 0.0
  %126 = vmatpush.msra.mxu0 0.0
  %127 = vmatpush.msra.mxu0 0.0
  %128 = vmatpush.msra.mxu0 0.0
  %129 = vmatpush.msra.mxu0 0.0
  %130 = vmatpush.msra.mxu0 0.0
  %131 = vmatpush.msra.mxu0 0.0
  %132 = vmatpush.msra.mxu0 0.0
  %133 = vmatpush.msra.mxu0 0.0
  %134 = vmatpush.msra.mxu0 0.0
  %135 = vmatpush.msra.mxu0 0.0
  %136 = vmatpush.msra.mxu0 0.0
  %137 = vmatpush.msra.mxu0 0.0
  %138 = vmatpush.msra.mxu0 0.0
  %139 = vmatpush.msra.mxu0 %v51
  %140 = vmatmul.f32.gmra.mxu0 %v62
  %v141 = vpop.f32.mrf.mxu0
  %v142 = vadd.f32 0.0, %v141
  %143 = vdwg.mxu0
  %144 = vmatpush.msra.mxu0 0.0
  %145 = vmatpush.msra.mxu0 0.0
  %146 = vmatpush.msra.mxu0 0.0
  %147 = vmatpush.msra.mxu0 0.0
  %148 = vmatpush.msra.mxu0 0.0
  %149 = vmatpush.msra.mxu0 0.0
  %150 = vmatpush.msra.mxu0 0.0
  %151 = vmatpush.msra.mxu0 0.0
  %152 = vmatpush.msra.mxu0 0.0
  %153 = vmatpush.msra.mxu0 0.0
  %154 = vmatpush.msra.mxu0 0.0
  %155 = vmatpush.msra.mxu0 0.0
  %156 = vmatpush.msra.mxu0 0.0
  %157 = vmatpush.msra.mxu0 0.0
  %158 = vmatpush.msra.mxu0 0.0
  %159 = vmatpush.msra.mxu0 %v52
  %160 = vmatmul.f32.gmra.mxu0 %v62
  %v161 = vpop.f32.mrf.mxu0
  %v162 = vadd.f32 0.0, %v161
  %163 = vdwg.mxu0
  %164 = vmatpush.msra.mxu0 0.0
  %165 = vmatpush.msra.mxu0 0.0
  %166 = vmatpush.msra.mxu0 0.0
  %167 = vmatpush.msra.mxu0 0.0
  %168 = vmatpush.msra.mxu0 0.0
  %169 = vmatpush.msra.mxu0 0.0
  %170 = vmatpush.msra.mxu0 0.0
  %171 = vmatpush.msra.mxu0 0.0
  %172 = vmatpush.msra.mxu0 0.0
  %173 = vmatpush.msra.mxu0 0.0
  %174 = vmatpush.msra.mxu0 0.0
  %175 = vmatpush.msra.mxu0 0.0
  %176 = vmatpush.msra.mxu0 0.0
  %177 = vmatpush.msra.mxu0 0.0
  %178 = vmatpush.msra.mxu0 0.0
  %179 = vmatpush.msra.mxu0 %v53
  %180 = vmatmul.f32.gmra.mxu0 %v62
  %v181 = vpop.f32.mrf.mxu0
  %v182 = vadd.f32 0.0, %v181
  %183 = vdwg.mxu0
  %v185 = vsel %vm60, %v22, 0
  %187 = vmatpush.msra.mxu0 0.0
  %188 = vmatpush.msra.mxu0 0.0
  %189 = vmatpush.msra.mxu0 0.0
  %190 = vmatpush.msra.mxu0 0.0
  %191 = vmatpush.msra.mxu0 0.0
  %192 = vmatpush.msra.mxu0 0.0
  %193 = vmatpush.msra.mxu0 0.0
  %194 = vmatpush.msra.mxu0 0.0
  %195 = vmatpush.msra.mxu0 0.0
  %196 = vmatpush.msra.mxu0 0.0
  %197 = vmatpush.msra.mxu0 0.0
  %198 = vmatpush.msra.mxu0 0.0
  %199 = vmatpush.msra.mxu0 0.0
  %200 = vmatpush.msra.mxu0 0.0
  %201 = vmatpush.msra.mxu0 0.0
  %202 = vmatpush.msra.mxu0 %v16
  %203 = vmatmul.f32.gmra.mxu0 %v185
  %v204 = vpop.f32.mrf.mxu0
  %v205 = vadd.f32 %v82, %v204
  %206 = vdwg.mxu0
  %207 = vmatpush.msra.mxu0 0.0
  %208 = vmatpush.msra.mxu0 0.0
  %209 = vmatpush.msra.mxu0 0.0
  %210 = vmatpush.msra.mxu0 0.0
  %211 = vmatpush.msra.mxu0 0.0
  %212 = vmatpush.msra.mxu0 0.0
  %213 = vmatpush.msra.mxu0 0.0
  %214 = vmatpush.msra.mxu0 0.0
  %215 = vmatpush.msra.mxu0 0.0
  %216 = vmatpush.msra.mxu0 0.0
  %217 = vmatpush.msra.mxu0 0.0
  %218 = vmatpush.msra.mxu0 0.0
  %219 = vmatpush.msra.mxu0 0.0
  %220 = vmatpush.msra.mxu0 0.0
  %221 = vmatpush.msra.mxu0 0.0
  %222 = vmatpush.msra.mxu0 %v17
  %223 = vmatmul.f32.gmra.mxu0 %v185
  %v224 = vpop.f32.mrf.mxu0
  %v225 = vadd.f32 %v102, %v224
  %226 = vdwg.mxu0
  %227 = vmatpush.msra.mxu0 0.0
  %228 = vmatpush.msra.mxu0 0.0
  %229 = vmatpush.msra.mxu0 0.0
  %230 = vmatpush.msra.mxu0 0.0
  %231 = vmatpush.msra.mxu0 0.0
  %232 = vmatpush.msra.mxu0 0.0
  %233 = vmatpush.msra.mxu0 0.0
  %234 = vmatpush.msra.mxu0 0.0
  %235 = vmatpush.msra.mxu0 0.0
  %236 = vmatpush.msra.mxu0 0.0
  %237 = vmatpush.msra.mxu0 0.0
  %238 = vmatpush.msra.mxu0 0.0
  %239 = vmatpush.msra.mxu0 0.0
  %240 = vmatpush.msra.mxu0 0.0
  %241 = vmatpush.msra.mxu0 0.0
  %242 = vmatpush.msra.mxu0 %v18
  %243 = vmatmul.f32.gmra.mxu0 %v185
  %v244 = vpop.f32.mrf.mxu0
  %v245 = vadd.f32 %v122, %v244
  %246 = vdwg.mxu0
  %247 = vmatpush.msra.mxu0 0.0
  %248 = vmatpush.msra.mxu0 0.0
  %249 = vmatpush.msra.mxu0 0.0
  %250 = vmatpush.msra.mxu0 0.0
  %251 = vmatpush.msra.mxu0 0.0
  %252 = vmatpush.msra.mxu0 0.0
  %253 = vmatpush.msra.mxu0 0.0
  %254 = vmatpush.msra.mxu0 0.0
  %255 = vmatpush.msra.mxu0 0.0
  %256 = vmatpush.msra.mxu0 0.0
  %257 = vmatpush.msra.mxu0 0.0
  %258 = vmatpush.msra.mxu0 0.0
  %259 = vmatpush.msra.mxu0 0.0
  %260 = vmatpush.msra.mxu0 0.0
  %261 = vmatpush.msra.mxu0 0.0
  %262 = vmatpush.msra.mxu0 %v19
  %263 = vmatmul.f32.gmra.mxu0 %v185
  %v264 = vpop.f32.mrf.mxu0
  %v265 = vadd.f32 %v142, %v264
  %266 = vdwg.mxu0
  %267 = vmatpush.msra.mxu0 0.0
  %268 = vmatpush.msra.mxu0 0.0
  %269 = vmatpush.msra.mxu0 0.0
  %270 = vmatpush.msra.mxu0 0.0
  %271 = vmatpush.msra.mxu0 0.0
  %272 = vmatpush.msra.mxu0 0.0
  %273 = vmatpush.msra.mxu0 0.0
  %274 = vmatpush.msra.mxu0 0.0
  %275 = vmatpush.msra.mxu0 0.0
  %276 = vmatpush.msra.mxu0 0.0
  %277 = vmatpush.msra.mxu0 0.0
  %278 = vmatpush.msra.mxu0 0.0
  %279 = vmatpush.msra.mxu0 0.0
  %280 = vmatpush.msra.mxu0 0.0
  %281 = vmatpush.msra.mxu0 0.0
  %282 = vmatpush.msra.mxu0 %v20
  %283 = vmatmul.f32.gmra.mxu0 %v185
  %v284 = vpop.f32.mrf.mxu0
  %v285 = vadd.f32 %v162, %v284
  %286 = vdwg.mxu0
  %287 = vmatpush.msra.mxu0 0.0
  %288 = vmatpush.msra.mxu0 0.0
  %289 = vmatpush.msra.mxu0 0.0
  %290 = vmatpush.msra.mxu0 0.0
  %291 = vmatpush.msra.mxu0 0.0
  %292 = vmatpush.msra.mxu0 0.0
  %293 = vmatpush.msra.mxu0 0.0
  %294 = vmatpush.msra.mxu0 0.0
  %295 = vmatpush.msra.mxu0 0.0
  %296 = vmatpush.msra.mxu0 0.0
  %297 = vmatpush.msra.mxu0 0.0
  %298 = vmatpush.msra.mxu0 0.0
  %299 = vmatpush.msra.mxu0 0.0
  %300 = vmatpush.msra.mxu0 0.0
  %301 = vmatpush.msra.mxu0 0.0
  %302 = vmatpush.msra.mxu0 %v21
  %303 = vmatmul.f32.gmra.mxu0 %v185
  %v304 = vpop.f32.mrf.mxu0
  %v305 = vadd.f32 %v182, %v304
  %306 = vdwg.mxu0
  %s307 = scalar_lea.vmem %s1, 16
  %v308 = vld [vmem:[%s307] sm:$0xff]
  %309 = vrot.lane.b32.xlu0 %v16, 126
  %v310 = vpop.permute.xlu0 %309
  %311 = vrot.lane.b32.xlu0 %v17, 126
  %v312 = vpop.permute.xlu0 %311
  %313 = vrot.lane.b32.xlu0 %v18, 126
  %v314 = vpop.permute.xlu0 %313
  %315 = vrot.lane.b32.xlu0 %v19, 126
  %v316 = vpop.permute.xlu0 %315
  %317 = vrot.lane.b32.xlu0 %v20, 126
  %v318 = vpop.permute.xlu0 %317
  %319 = vrot.lane.b32.xlu0 %v21, 126
  %v320 = vpop.permute.xlu0 %319
  %321 = vrot.lane.b32.xlu0 %v23, 126
  %v322 = vpop.permute.xlu0 %321
  %vm323 = vcmask 1031168
  %v324 = vsel %vm323, %v310, %v312
  %v325 = vsel %vm323, %v312, %v314
  %v326 = vsel %vm323, %v314, %v316
  %v327 = vsel %vm323, %v316, %v318
  %v328 = vsel %vm323, %v318, %v320
  %v329 = vsel %vm323, %v320, %v322
  %v337 = vsel %vm60, %v308, 0
  %339 = vmatpush.msra.mxu0 0.0
  %340 = vmatpush.msra.mxu0 0.0
  %341 = vmatpush.msra.mxu0 0.0
  %342 = vmatpush.msra.mxu0 0.0
  %343 = vmatpush.msra.mxu0 0.0
  %344 = vmatpush.msra.mxu0 0.0
  %345 = vmatpush.msra.mxu0 0.0
  %346 = vmatpush.msra.mxu0 0.0
  %347 = vmatpush.msra.mxu0 0.0
  %348 = vmatpush.msra.mxu0 0.0
  %349 = vmatpush.msra.mxu0 0.0
  %350 = vmatpush.msra.mxu0 0.0
  %351 = vmatpush.msra.mxu0 0.0
  %352 = vmatpush.msra.mxu0 0.0
  %353 = vmatpush.msra.mxu0 0.0
  %354 = vmatpush.msra.mxu0 %v324
  %355 = vmatmul.f32.gmra.mxu0 %v337
  %v356 = vpop.f32.mrf.mxu0
  %v357 = vadd.f32 0.0, %v356
  %358 = vdwg.mxu0
  %359 = vmatpush.msra.mxu0 0.0
  %360 = vmatpush.msra.mxu0 0.0
  %361 = vmatpush.msra.mxu0 0.0
  %362 = vmatpush.msra.mxu0 0.0
  %363 = vmatpush.msra.mxu0 0.0
  %364 = vmatpush.msra.mxu0 0.0
  %365 = vmatpush.msra.mxu0 0.0
  %366 = vmatpush.msra.mxu0 0.0
  %367 = vmatpush.msra.mxu0 0.0
  %368 = vmatpush.msra.mxu0 0.0
  %369 = vmatpush.msra.mxu0 0.0
  %370 = vmatpush.msra.mxu0 0.0
  %371 = vmatpush.msra.mxu0 0.0
  %372 = vmatpush.msra.mxu0 0.0
  %373 = vmatpush.msra.mxu0 0.0
  %374 = vmatpush.msra.mxu0 %v325
  %375 = vmatmul.f32.gmra.mxu0 %v337
  %v376 = vpop.f32.mrf.mxu0
  %v377 = vadd.f32 0.0, %v376
  %378 = vdwg.mxu0
  %379 = vmatpush.msra.mxu0 0.0
  %380 = vmatpush.msra.mxu0 0.0
  %381 = vmatpush.msra.mxu0 0.0
  %382 = vmatpush.msra.mxu0 0.0
  %383 = vmatpush.msra.mxu0 0.0
  %384 = vmatpush.msra.mxu0 0.0
  %385 = vmatpush.msra.mxu0 0.0
  %386 = vmatpush.msra.mxu0 0.0
  %387 = vmatpush.msra.mxu0 0.0
  %388 = vmatpush.msra.mxu0 0.0
  %389 = vmatpush.msra.mxu0 0.0
  %390 = vmatpush.msra.mxu0 0.0
  %391 = vmatpush.msra.mxu0 0.0
  %392 = vmatpush.msra.mxu0 0.0
  %393 = vmatpush.msra.mxu0 0.0
  %394 = vmatpush.msra.mxu0 %v326
  %395 = vmatmul.f32.gmra.mxu0 %v337
  %v396 = vpop.f32.mrf.mxu0
  %v397 = vadd.f32 0.0, %v396
  %398 = vdwg.mxu0
  %399 = vmatpush.msra.mxu0 0.0
  %400 = vmatpush.msra.mxu0 0.0
  %401 = vmatpush.msra.mxu0 0.0
  %402 = vmatpush.msra.mxu0 0.0
  %403 = vmatpush.msra.mxu0 0.0
  %404 = vmatpush.msra.mxu0 0.0
  %405 = vmatpush.msra.mxu0 0.0
  %406 = vmatpush.msra.mxu0 0.0
  %407 = vmatpush.msra.mxu0 0.0
  %408 = vmatpush.msra.mxu0 0.0
  %409 = vmatpush.msra.mxu0 0.0
  %410 = vmatpush.msra.mxu0 0.0
  %411 = vmatpush.msra.mxu0 0.0
  %412 = vmatpush.msra.mxu0 0.0
  %413 = vmatpush.msra.mxu0 0.0
  %414 = vmatpush.msra.mxu0 %v327
  %415 = vmatmul.f32.gmra.mxu0 %v337
  %v416 = vpop.f32.mrf.mxu0
  %v417 = vadd.f32 0.0, %v416
  %418 = vdwg.mxu0
  %419 = vmatpush.msra.mxu0 0.0
  %420 = vmatpush.msra.mxu0 0.0
  %421 = vmatpush.msra.mxu0 0.0
  %422 = vmatpush.msra.mxu0 0.0
  %423 = vmatpush.msra.mxu0 0.0
  %424 = vmatpush.msra.mxu0 0.0
  %425 = vmatpush.msra.mxu0 0.0
  %426 = vmatpush.msra.mxu0 0.0
  %427 = vmatpush.msra.mxu0 0.0
  %428 = vmatpush.msra.mxu0 0.0
  %429 = vmatpush.msra.mxu0 0.0
  %430 = vmatpush.msra.mxu0 0.0
  %431 = vmatpush.msra.mxu0 0.0
  %432 = vmatpush.msra.mxu0 0.0
  %433 = vmatpush.msra.mxu0 0.0
  %434 = vmatpush.msra.mxu0 %v328
  %435 = vmatmul.f32.gmra.mxu0 %v337
  %v436 = vpop.f32.mrf.mxu0
  %v437 = vadd.f32 0.0, %v436
  %438 = vdwg.mxu0
  %439 = vmatpush.msra.mxu0 0.0
  %440 = vmatpush.msra.mxu0 0.0
  %441 = vmatpush.msra.mxu0 0.0
  %442 = vmatpush.msra.mxu0 0.0
  %443 = vmatpush.msra.mxu0 0.0
  %444 = vmatpush.msra.mxu0 0.0
  %445 = vmatpush.msra.mxu0 0.0
  %446 = vmatpush.msra.mxu0 0.0
  %447 = vmatpush.msra.mxu0 0.0
  %448 = vmatpush.msra.mxu0 0.0
  %449 = vmatpush.msra.mxu0 0.0
  %450 = vmatpush.msra.mxu0 0.0
  %451 = vmatpush.msra.mxu0 0.0
  %452 = vmatpush.msra.mxu0 0.0
  %453 = vmatpush.msra.mxu0 0.0
  %454 = vmatpush.msra.mxu0 %v329
  %455 = vmatmul.f32.gmra.mxu0 %v337
  %v456 = vpop.f32.mrf.mxu0
  %v457 = vadd.f32 0.0, %v456
  %458 = vdwg.mxu0
  %v459 = vadd.f32 %v205, %v357
  %v460 = vadd.f32 %v225, %v377
  %v461 = vadd.f32 %v245, %v397
  %v462 = vadd.f32 %v265, %v417
  %v463 = vadd.f32 %v285, %v437
  %v464 = vadd.f32 %v305, %v457
  %s465 = scalar_lea.vmem %s1, 24
  %v466 = vld [vmem:[%s465] sm:$0xff]
  %467 = vrot.lane.b32.xlu0 %v16, 110
  %v468 = vpop.permute.xlu0 %467
  %469 = vrot.lane.b32.xlu0 %v17, 110
  %v470 = vpop.permute.xlu0 %469
  %471 = vrot.lane.b32.xlu0 %v18, 110
  %v472 = vpop.permute.xlu0 %471
  %473 = vrot.lane.b32.xlu0 %v19, 110
  %v474 = vpop.permute.xlu0 %473
  %475 = vrot.lane.b32.xlu0 %v20, 110
  %v476 = vpop.permute.xlu0 %475
  %477 = vrot.lane.b32.xlu0 %v21, 110
  %v478 = vpop.permute.xlu0 %477
  %479 = vrot.lane.b32.xlu0 %v23, 110
  %v480 = vpop.permute.xlu0 %479
  %vm481 = vcmask 900096
  %v482 = vsel %vm481, %v468, %v470
  %v483 = vsel %vm481, %v470, %v472
  %v484 = vsel %vm481, %v472, %v474
  %v485 = vsel %vm481, %v474, %v476
  %v486 = vsel %vm481, %v476, %v478
  %v487 = vsel %vm481, %v478, %v480
  %v495 = vsel %vm60, %v466, 0
  %497 = vmatpush.msra.mxu0 0.0
  %498 = vmatpush.msra.mxu0 0.0
  %499 = vmatpush.msra.mxu0 0.0
  %500 = vmatpush.msra.mxu0 0.0
  %501 = vmatpush.msra.mxu0 0.0
  %502 = vmatpush.msra.mxu0 0.0
  %503 = vmatpush.msra.mxu0 0.0
  %504 = vmatpush.msra.mxu0 0.0
  %505 = vmatpush.msra.mxu0 0.0
  %506 = vmatpush.msra.mxu0 0.0
  %507 = vmatpush.msra.mxu0 0.0
  %508 = vmatpush.msra.mxu0 0.0
  %509 = vmatpush.msra.mxu0 0.0
  %510 = vmatpush.msra.mxu0 0.0
  %511 = vmatpush.msra.mxu0 0.0
  %512 = vmatpush.msra.mxu0 %v482
  %513 = vmatmul.f32.gmra.mxu0 %v495
  %v514 = vpop.f32.mrf.mxu0
  %v515 = vadd.f32 0.0, %v514
  %516 = vdwg.mxu0
  %517 = vmatpush.msra.mxu0 0.0
  %518 = vmatpush.msra.mxu0 0.0
  %519 = vmatpush.msra.mxu0 0.0
  %520 = vmatpush.msra.mxu0 0.0
  %521 = vmatpush.msra.mxu0 0.0
  %522 = vmatpush.msra.mxu0 0.0
  %523 = vmatpush.msra.mxu0 0.0
  %524 = vmatpush.msra.mxu0 0.0
  %525 = vmatpush.msra.mxu0 0.0
  %526 = vmatpush.msra.mxu0 0.0
  %527 = vmatpush.msra.mxu0 0.0
  %528 = vmatpush.msra.mxu0 0.0
  %529 = vmatpush.msra.mxu0 0.0
  %530 = vmatpush.msra.mxu0 0.0
  %531 = vmatpush.msra.mxu0 0.0
  %532 = vmatpush.msra.mxu0 %v483
  %533 = vmatmul.f32.gmra.mxu0 %v495
  %v534 = vpop.f32.mrf.mxu0
  %v535 = vadd.f32 0.0, %v534
  %536 = vdwg.mxu0
  %537 = vmatpush.msra.mxu0 0.0
  %538 = vmatpush.msra.mxu0 0.0
  %539 = vmatpush.msra.mxu0 0.0
  %540 = vmatpush.msra.mxu0 0.0
  %541 = vmatpush.msra.mxu0 0.0
  %542 = vmatpush.msra.mxu0 0.0
  %543 = vmatpush.msra.mxu0 0.0
  %544 = vmatpush.msra.mxu0 0.0
  %545 = vmatpush.msra.mxu0 0.0
  %546 = vmatpush.msra.mxu0 0.0
  %547 = vmatpush.msra.mxu0 0.0
  %548 = vmatpush.msra.mxu0 0.0
  %549 = vmatpush.msra.mxu0 0.0
  %550 = vmatpush.msra.mxu0 0.0
  %551 = vmatpush.msra.mxu0 0.0
  %552 = vmatpush.msra.mxu0 %v484
  %553 = vmatmul.f32.gmra.mxu0 %v495
  %v554 = vpop.f32.mrf.mxu0
  %v555 = vadd.f32 0.0, %v554
  %556 = vdwg.mxu0
  %557 = vmatpush.msra.mxu0 0.0
  %558 = vmatpush.msra.mxu0 0.0
  %559 = vmatpush.msra.mxu0 0.0
  %560 = vmatpush.msra.mxu0 0.0
  %561 = vmatpush.msra.mxu0 0.0
  %562 = vmatpush.msra.mxu0 0.0
  %563 = vmatpush.msra.mxu0 0.0
  %564 = vmatpush.msra.mxu0 0.0
  %565 = vmatpush.msra.mxu0 0.0
  %566 = vmatpush.msra.mxu0 0.0
  %567 = vmatpush.msra.mxu0 0.0
  %568 = vmatpush.msra.mxu0 0.0
  %569 = vmatpush.msra.mxu0 0.0
  %570 = vmatpush.msra.mxu0 0.0
  %571 = vmatpush.msra.mxu0 0.0
  %572 = vmatpush.msra.mxu0 %v485
  %573 = vmatmul.f32.gmra.mxu0 %v495
  %v574 = vpop.f32.mrf.mxu0
  %v575 = vadd.f32 0.0, %v574
  %576 = vdwg.mxu0
  %577 = vmatpush.msra.mxu0 0.0
  %578 = vmatpush.msra.mxu0 0.0
  %579 = vmatpush.msra.mxu0 0.0
  %580 = vmatpush.msra.mxu0 0.0
  %581 = vmatpush.msra.mxu0 0.0
  %582 = vmatpush.msra.mxu0 0.0
  %583 = vmatpush.msra.mxu0 0.0
  %584 = vmatpush.msra.mxu0 0.0
  %585 = vmatpush.msra.mxu0 0.0
  %586 = vmatpush.msra.mxu0 0.0
  %587 = vmatpush.msra.mxu0 0.0
  %588 = vmatpush.msra.mxu0 0.0
  %589 = vmatpush.msra.mxu0 0.0
  %590 = vmatpush.msra.mxu0 0.0
  %591 = vmatpush.msra.mxu0 0.0
  %592 = vmatpush.msra.mxu0 %v486
  %593 = vmatmul.f32.gmra.mxu0 %v495
  %v594 = vpop.f32.mrf.mxu0
  %v595 = vadd.f32 0.0, %v594
  %596 = vdwg.mxu0
  %597 = vmatpush.msra.mxu0 0.0
  %598 = vmatpush.msra.mxu0 0.0
  %599 = vmatpush.msra.mxu0 0.0
  %600 = vmatpush.msra.mxu0 0.0
  %601 = vmatpush.msra.mxu0 0.0
  %602 = vmatpush.msra.mxu0 0.0
  %603 = vmatpush.msra.mxu0 0.0
  %604 = vmatpush.msra.mxu0 0.0
  %605 = vmatpush.msra.mxu0 0.0
  %606 = vmatpush.msra.mxu0 0.0
  %607 = vmatpush.msra.mxu0 0.0
  %608 = vmatpush.msra.mxu0 0.0
  %609 = vmatpush.msra.mxu0 0.0
  %610 = vmatpush.msra.mxu0 0.0
  %611 = vmatpush.msra.mxu0 0.0
  %612 = vmatpush.msra.mxu0 %v487
  %613 = vmatmul.f32.gmra.mxu0 %v495
  %v614 = vpop.f32.mrf.mxu0
  %v615 = vadd.f32 0.0, %v614
  %616 = vdwg.mxu0
  %v617 = vadd.f32 %v459, %v515
  %v618 = vadd.f32 %v460, %v535
  %v619 = vadd.f32 %v461, %v555
  %v620 = vadd.f32 %v462, %v575
  %v621 = vadd.f32 %v463, %v595
  %v622 = vadd.f32 %v464, %v615
  %s623 = scalar_lea.vmem %s1, 32
  %v624 = vld [vmem:[%s623] sm:$0xff]
  %625 = vrot.lane.b32.xlu0 %v16, 109
  %v626 = vpop.permute.xlu0 %625
  %627 = vrot.lane.b32.xlu0 %v17, 109
  %v628 = vpop.permute.xlu0 %627
  %629 = vrot.lane.b32.xlu0 %v18, 109
  %v630 = vpop.permute.xlu0 %629
  %631 = vrot.lane.b32.xlu0 %v19, 109
  %v632 = vpop.permute.xlu0 %631
  %633 = vrot.lane.b32.xlu0 %v20, 109
  %v634 = vpop.permute.xlu0 %633
  %635 = vrot.lane.b32.xlu0 %v21, 109
  %v636 = vpop.permute.xlu0 %635
  %637 = vrot.lane.b32.xlu0 %v23, 109
  %v638 = vpop.permute.xlu0 %637
  %vm639 = vcmask 891904
  %v640 = vsel %vm639, %v626, %v628
  %v641 = vsel %vm639, %v628, %v630
  %v642 = vsel %vm639, %v630, %v632
  %v643 = vsel %vm639, %v632, %v634
  %v644 = vsel %vm639, %v634, %v636
  %v645 = vsel %vm639, %v636, %v638
  %v653 = vsel %vm60, %v624, 0
  %655 = vmatpush.msra.mxu0 0.0
  %656 = vmatpush.msra.mxu0 0.0
  %657 = vmatpush.msra.mxu0 0.0
  %658 = vmatpush.msra.mxu0 0.0
  %659 = vmatpush.msra.mxu0 0.0
  %660 = vmatpush.msra.mxu0 0.0
  %661 = vmatpush.msra.mxu0 0.0
  %662 = vmatpush.msra.mxu0 0.0
  %663 = vmatpush.msra.mxu0 0.0
  %664 = vmatpush.msra.mxu0 0.0
  %665 = vmatpush.msra.mxu0 0.0
  %666 = vmatpush.msra.mxu0 0.0
  %667 = vmatpush.msra.mxu0 0.0
  %668 = vmatpush.msra.mxu0 0.0
  %669 = vmatpush.msra.mxu0 0.0
  %670 = vmatpush.msra.mxu0 %v640
  %671 = vmatmul.f32.gmra.mxu0 %v653
  %v672 = vpop.f32.mrf.mxu0
  %v673 = vadd.f32 0.0, %v672
  %674 = vdwg.mxu0
  %675 = vmatpush.msra.mxu0 0.0
  %676 = vmatpush.msra.mxu0 0.0
  %677 = vmatpush.msra.mxu0 0.0
  %678 = vmatpush.msra.mxu0 0.0
  %679 = vmatpush.msra.mxu0 0.0
  %680 = vmatpush.msra.mxu0 0.0
  %681 = vmatpush.msra.mxu0 0.0
  %682 = vmatpush.msra.mxu0 0.0
  %683 = vmatpush.msra.mxu0 0.0
  %684 = vmatpush.msra.mxu0 0.0
  %685 = vmatpush.msra.mxu0 0.0
  %686 = vmatpush.msra.mxu0 0.0
  %687 = vmatpush.msra.mxu0 0.0
  %688 = vmatpush.msra.mxu0 0.0
  %689 = vmatpush.msra.mxu0 0.0
  %690 = vmatpush.msra.mxu0 %v641
  %691 = vmatmul.f32.gmra.mxu0 %v653
  %v692 = vpop.f32.mrf.mxu0
  %v693 = vadd.f32 0.0, %v692
  %694 = vdwg.mxu0
  %695 = vmatpush.msra.mxu0 0.0
  %696 = vmatpush.msra.mxu0 0.0
  %697 = vmatpush.msra.mxu0 0.0
  %698 = vmatpush.msra.mxu0 0.0
  %699 = vmatpush.msra.mxu0 0.0
  %700 = vmatpush.msra.mxu0 0.0
  %701 = vmatpush.msra.mxu0 0.0
  %702 = vmatpush.msra.mxu0 0.0
  %703 = vmatpush.msra.mxu0 0.0
  %704 = vmatpush.msra.mxu0 0.0
  %705 = vmatpush.msra.mxu0 0.0
  %706 = vmatpush.msra.mxu0 0.0
  %707 = vmatpush.msra.mxu0 0.0
  %708 = vmatpush.msra.mxu0 0.0
  %709 = vmatpush.msra.mxu0 0.0
  %710 = vmatpush.msra.mxu0 %v642
  %711 = vmatmul.f32.gmra.mxu0 %v653
  %v712 = vpop.f32.mrf.mxu0
  %v713 = vadd.f32 0.0, %v712
  %714 = vdwg.mxu0
  %715 = vmatpush.msra.mxu0 0.0
  %716 = vmatpush.msra.mxu0 0.0
  %717 = vmatpush.msra.mxu0 0.0
  %718 = vmatpush.msra.mxu0 0.0
  %719 = vmatpush.msra.mxu0 0.0
  %720 = vmatpush.msra.mxu0 0.0
  %721 = vmatpush.msra.mxu0 0.0
  %722 = vmatpush.msra.mxu0 0.0
  %723 = vmatpush.msra.mxu0 0.0
  %724 = vmatpush.msra.mxu0 0.0
  %725 = vmatpush.msra.mxu0 0.0
  %726 = vmatpush.msra.mxu0 0.0
  %727 = vmatpush.msra.mxu0 0.0
  %728 = vmatpush.msra.mxu0 0.0
  %729 = vmatpush.msra.mxu0 0.0
  %730 = vmatpush.msra.mxu0 %v643
  %731 = vmatmul.f32.gmra.mxu0 %v653
  %v732 = vpop.f32.mrf.mxu0
  %v733 = vadd.f32 0.0, %v732
  %734 = vdwg.mxu0
  %735 = vmatpush.msra.mxu0 0.0
  %736 = vmatpush.msra.mxu0 0.0
  %737 = vmatpush.msra.mxu0 0.0
  %738 = vmatpush.msra.mxu0 0.0
  %739 = vmatpush.msra.mxu0 0.0
  %740 = vmatpush.msra.mxu0 0.0
  %741 = vmatpush.msra.mxu0 0.0
  %742 = vmatpush.msra.mxu0 0.0
  %743 = vmatpush.msra.mxu0 0.0
  %744 = vmatpush.msra.mxu0 0.0
  %745 = vmatpush.msra.mxu0 0.0
  %746 = vmatpush.msra.mxu0 0.0
  %747 = vmatpush.msra.mxu0 0.0
  %748 = vmatpush.msra.mxu0 0.0
  %749 = vmatpush.msra.mxu0 0.0
  %750 = vmatpush.msra.mxu0 %v644
  %751 = vmatmul.f32.gmra.mxu0 %v653
  %v752 = vpop.f32.mrf.mxu0
  %v753 = vadd.f32 0.0, %v752
  %754 = vdwg.mxu0
  %755 = vmatpush.msra.mxu0 0.0
  %756 = vmatpush.msra.mxu0 0.0
  %757 = vmatpush.msra.mxu0 0.0
  %758 = vmatpush.msra.mxu0 0.0
  %759 = vmatpush.msra.mxu0 0.0
  %760 = vmatpush.msra.mxu0 0.0
  %761 = vmatpush.msra.mxu0 0.0
  %762 = vmatpush.msra.mxu0 0.0
  %763 = vmatpush.msra.mxu0 0.0
  %764 = vmatpush.msra.mxu0 0.0
  %765 = vmatpush.msra.mxu0 0.0
  %766 = vmatpush.msra.mxu0 0.0
  %767 = vmatpush.msra.mxu0 0.0
  %768 = vmatpush.msra.mxu0 0.0
  %769 = vmatpush.msra.mxu0 0.0
  %770 = vmatpush.msra.mxu0 %v645
  %771 = vmatmul.f32.gmra.mxu0 %v653
  %v772 = vpop.f32.mrf.mxu0
  %v773 = vadd.f32 0.0, %v772
  %774 = vdwg.mxu0
  %v775 = vadd.f32 %v617, %v673
  %v776 = vadd.f32 %v618, %v693
  %v777 = vadd.f32 %v619, %v713
  %v778 = vadd.f32 %v620, %v733
  %v779 = vadd.f32 %v621, %v753
  %v780 = vadd.f32 %v622, %v773
  %s781 = scalar_lea.vmem %s1, 40
  %v782 = vld [vmem:[%s781] sm:$0xff]
  %783 = vrot.lane.b32.xlu0 %v16, 108
  %v784 = vpop.permute.xlu0 %783
  %785 = vrot.lane.b32.xlu0 %v17, 108
  %v786 = vpop.permute.xlu0 %785
  %787 = vrot.lane.b32.xlu0 %v18, 108
  %v788 = vpop.permute.xlu0 %787
  %789 = vrot.lane.b32.xlu0 %v19, 108
  %v790 = vpop.permute.xlu0 %789
  %791 = vrot.lane.b32.xlu0 %v20, 108
  %v792 = vpop.permute.xlu0 %791
  %793 = vrot.lane.b32.xlu0 %v21, 108
  %v794 = vpop.permute.xlu0 %793
  %795 = vrot.lane.b32.xlu0 %v23, 108
  %v796 = vpop.permute.xlu0 %795
  %vm797 = vcmask 883712
  %v798 = vsel %vm797, %v784, %v786
  %v799 = vsel %vm797, %v786, %v788
  %v800 = vsel %vm797, %v788, %v790
  %v801 = vsel %vm797, %v790, %v792
  %v802 = vsel %vm797, %v792, %v794
  %v803 = vsel %vm797, %v794, %v796
  %v811 = vsel %vm60, %v782, 0
  %813 = vmatpush.msra.mxu0 0.0
  %814 = vmatpush.msra.mxu0 0.0
  %815 = vmatpush.msra.mxu0 0.0
  %816 = vmatpush.msra.mxu0 0.0
  %817 = vmatpush.msra.mxu0 0.0
  %818 = vmatpush.msra.mxu0 0.0
  %819 = vmatpush.msra.mxu0 0.0
  %820 = vmatpush.msra.mxu0 0.0
  %821 = vmatpush.msra.mxu0 0.0
  %822 = vmatpush.msra.mxu0 0.0
  %823 = vmatpush.msra.mxu0 0.0
  %824 = vmatpush.msra.mxu0 0.0
  %825 = vmatpush.msra.mxu0 0.0
  %826 = vmatpush.msra.mxu0 0.0
  %827 = vmatpush.msra.mxu0 0.0
  %828 = vmatpush.msra.mxu0 %v798
  %829 = vmatmul.f32.gmra.mxu0 %v811
  %v830 = vpop.f32.mrf.mxu0
  %v831 = vadd.f32 0.0, %v830
  %832 = vdwg.mxu0
  %833 = vmatpush.msra.mxu0 0.0
  %834 = vmatpush.msra.mxu0 0.0
  %835 = vmatpush.msra.mxu0 0.0
  %836 = vmatpush.msra.mxu0 0.0
  %837 = vmatpush.msra.mxu0 0.0
  %838 = vmatpush.msra.mxu0 0.0
  %839 = vmatpush.msra.mxu0 0.0
  %840 = vmatpush.msra.mxu0 0.0
  %841 = vmatpush.msra.mxu0 0.0
  %842 = vmatpush.msra.mxu0 0.0
  %843 = vmatpush.msra.mxu0 0.0
  %844 = vmatpush.msra.mxu0 0.0
  %845 = vmatpush.msra.mxu0 0.0
  %846 = vmatpush.msra.mxu0 0.0
  %847 = vmatpush.msra.mxu0 0.0
  %848 = vmatpush.msra.mxu0 %v799
  %849 = vmatmul.f32.gmra.mxu0 %v811
  %v850 = vpop.f32.mrf.mxu0
  %v851 = vadd.f32 0.0, %v850
  %852 = vdwg.mxu0
  %853 = vmatpush.msra.mxu0 0.0
  %854 = vmatpush.msra.mxu0 0.0
  %855 = vmatpush.msra.mxu0 0.0
  %856 = vmatpush.msra.mxu0 0.0
  %857 = vmatpush.msra.mxu0 0.0
  %858 = vmatpush.msra.mxu0 0.0
  %859 = vmatpush.msra.mxu0 0.0
  %860 = vmatpush.msra.mxu0 0.0
  %861 = vmatpush.msra.mxu0 0.0
  %862 = vmatpush.msra.mxu0 0.0
  %863 = vmatpush.msra.mxu0 0.0
  %864 = vmatpush.msra.mxu0 0.0
  %865 = vmatpush.msra.mxu0 0.0
  %866 = vmatpush.msra.mxu0 0.0
  %867 = vmatpush.msra.mxu0 0.0
  %868 = vmatpush.msra.mxu0 %v800
  %869 = vmatmul.f32.gmra.mxu0 %v811
  %v870 = vpop.f32.mrf.mxu0
  %v871 = vadd.f32 0.0, %v870
  %872 = vdwg.mxu0
  %873 = vmatpush.msra.mxu0 0.0
  %874 = vmatpush.msra.mxu0 0.0
  %875 = vmatpush.msra.mxu0 0.0
  %876 = vmatpush.msra.mxu0 0.0
  %877 = vmatpush.msra.mxu0 0.0
  %878 = vmatpush.msra.mxu0 0.0
  %879 = vmatpush.msra.mxu0 0.0
  %880 = vmatpush.msra.mxu0 0.0
  %881 = vmatpush.msra.mxu0 0.0
  %882 = vmatpush.msra.mxu0 0.0
  %883 = vmatpush.msra.mxu0 0.0
  %884 = vmatpush.msra.mxu0 0.0
  %885 = vmatpush.msra.mxu0 0.0
  %886 = vmatpush.msra.mxu0 0.0
  %887 = vmatpush.msra.mxu0 0.0
  %888 = vmatpush.msra.mxu0 %v801
  %889 = vmatmul.f32.gmra.mxu0 %v811
  %v890 = vpop.f32.mrf.mxu0
  %v891 = vadd.f32 0.0, %v890
  %892 = vdwg.mxu0
  %893 = vmatpush.msra.mxu0 0.0
  %894 = vmatpush.msra.mxu0 0.0
  %895 = vmatpush.msra.mxu0 0.0
  %896 = vmatpush.msra.mxu0 0.0
  %897 = vmatpush.msra.mxu0 0.0
  %898 = vmatpush.msra.mxu0 0.0
  %899 = vmatpush.msra.mxu0 0.0
  %900 = vmatpush.msra.mxu0 0.0
  %901 = vmatpush.msra.mxu0 0.0
  %902 = vmatpush.msra.mxu0 0.0
  %903 = vmatpush.msra.mxu0 0.0
  %904 = vmatpush.msra.mxu0 0.0
  %905 = vmatpush.msra.mxu0 0.0
  %906 = vmatpush.msra.mxu0 0.0
  %907 = vmatpush.msra.mxu0 0.0
  %908 = vmatpush.msra.mxu0 %v802
  %909 = vmatmul.f32.gmra.mxu0 %v811
  %v910 = vpop.f32.mrf.mxu0
  %v911 = vadd.f32 0.0, %v910
  %912 = vdwg.mxu0
  %913 = vmatpush.msra.mxu0 0.0
  %914 = vmatpush.msra.mxu0 0.0
  %915 = vmatpush.msra.mxu0 0.0
  %916 = vmatpush.msra.mxu0 0.0
  %917 = vmatpush.msra.mxu0 0.0
  %918 = vmatpush.msra.mxu0 0.0
  %919 = vmatpush.msra.mxu0 0.0
  %920 = vmatpush.msra.mxu0 0.0
  %921 = vmatpush.msra.mxu0 0.0
  %922 = vmatpush.msra.mxu0 0.0
  %923 = vmatpush.msra.mxu0 0.0
  %924 = vmatpush.msra.mxu0 0.0
  %925 = vmatpush.msra.mxu0 0.0
  %926 = vmatpush.msra.mxu0 0.0
  %927 = vmatpush.msra.mxu0 0.0
  %928 = vmatpush.msra.mxu0 %v803
  %929 = vmatmul.f32.gmra.mxu0 %v811
  %v930 = vpop.f32.mrf.mxu0
  %v931 = vadd.f32 0.0, %v930
  %932 = vdwg.mxu0
  %v933 = vadd.f32 %v775, %v831
  %v934 = vadd.f32 %v776, %v851
  %v935 = vadd.f32 %v777, %v871
  %v936 = vadd.f32 %v778, %v891
  %v937 = vadd.f32 %v779, %v911
  %v938 = vadd.f32 %v780, %v931
  %s939 = scalar_lea.vmem %s1, 48
  %v940 = vld [vmem:[%s939] sm:$0xff]
  %941 = vrot.lane.b32.xlu0 %v16, 92
  %v942 = vpop.permute.xlu0 %941
  %943 = vrot.lane.b32.xlu0 %v17, 92
  %v944 = vpop.permute.xlu0 %943
  %945 = vrot.lane.b32.xlu0 %v18, 92
  %v946 = vpop.permute.xlu0 %945
  %947 = vrot.lane.b32.xlu0 %v19, 92
  %v948 = vpop.permute.xlu0 %947
  %949 = vrot.lane.b32.xlu0 %v20, 92
  %v950 = vpop.permute.xlu0 %949
  %951 = vrot.lane.b32.xlu0 %v21, 92
  %v952 = vpop.permute.xlu0 %951
  %953 = vrot.lane.b32.xlu0 %v23, 92
  %v954 = vpop.permute.xlu0 %953
  %vm955 = vcmask 752640
  %v956 = vsel %vm955, %v942, %v944
  %v957 = vsel %vm955, %v944, %v946
  %v958 = vsel %vm955, %v946, %v948
  %v959 = vsel %vm955, %v948, %v950
  %v960 = vsel %vm955, %v950, %v952
  %v961 = vsel %vm955, %v952, %v954
  %v969 = vsel %vm60, %v940, 0
  %971 = vmatpush.msra.mxu0 0.0
  %972 = vmatpush.msra.mxu0 0.0
  %973 = vmatpush.msra.mxu0 0.0
  %974 = vmatpush.msra.mxu0 0.0
  %975 = vmatpush.msra.mxu0 0.0
  %976 = vmatpush.msra.mxu0 0.0
  %977 = vmatpush.msra.mxu0 0.0
  %978 = vmatpush.msra.mxu0 0.0
  %979 = vmatpush.msra.mxu0 0.0
  %980 = vmatpush.msra.mxu0 0.0
  %981 = vmatpush.msra.mxu0 0.0
  %982 = vmatpush.msra.mxu0 0.0
  %983 = vmatpush.msra.mxu0 0.0
  %984 = vmatpush.msra.mxu0 0.0
  %985 = vmatpush.msra.mxu0 0.0
  %986 = vmatpush.msra.mxu0 %v956
  %987 = vmatmul.f32.gmra.mxu0 %v969
  %v988 = vpop.f32.mrf.mxu0
  %v989 = vadd.f32 0.0, %v988
  %990 = vdwg.mxu0
  %991 = vmatpush.msra.mxu0 0.0
  %992 = vmatpush.msra.mxu0 0.0
  %993 = vmatpush.msra.mxu0 0.0
  %994 = vmatpush.msra.mxu0 0.0
  %995 = vmatpush.msra.mxu0 0.0
  %996 = vmatpush.msra.mxu0 0.0
  %997 = vmatpush.msra.mxu0 0.0
  %998 = vmatpush.msra.mxu0 0.0
  %999 = vmatpush.msra.mxu0 0.0
  %1000 = vmatpush.msra.mxu0 0.0
  %1001 = vmatpush.msra.mxu0 0.0
  %1002 = vmatpush.msra.mxu0 0.0
  %1003 = vmatpush.msra.mxu0 0.0
  %1004 = vmatpush.msra.mxu0 0.0
  %1005 = vmatpush.msra.mxu0 0.0
  %1006 = vmatpush.msra.mxu0 %v957
  %1007 = vmatmul.f32.gmra.mxu0 %v969
  %v1008 = vpop.f32.mrf.mxu0
  %v1009 = vadd.f32 0.0, %v1008
  %1010 = vdwg.mxu0
  %1011 = vmatpush.msra.mxu0 0.0
  %1012 = vmatpush.msra.mxu0 0.0
  %1013 = vmatpush.msra.mxu0 0.0
  %1014 = vmatpush.msra.mxu0 0.0
  %1015 = vmatpush.msra.mxu0 0.0
  %1016 = vmatpush.msra.mxu0 0.0
  %1017 = vmatpush.msra.mxu0 0.0
  %1018 = vmatpush.msra.mxu0 0.0
  %1019 = vmatpush.msra.mxu0 0.0
  %1020 = vmatpush.msra.mxu0 0.0
  %1021 = vmatpush.msra.mxu0 0.0
  %1022 = vmatpush.msra.mxu0 0.0
  %1023 = vmatpush.msra.mxu0 0.0
  %1024 = vmatpush.msra.mxu0 0.0
  %1025 = vmatpush.msra.mxu0 0.0
  %1026 = vmatpush.msra.mxu0 %v958
  %1027 = vmatmul.f32.gmra.mxu0 %v969
  %v1028 = vpop.f32.mrf.mxu0
  %v1029 = vadd.f32 0.0, %v1028
  %1030 = vdwg.mxu0
  %1031 = vmatpush.msra.mxu0 0.0
  %1032 = vmatpush.msra.mxu0 0.0
  %1033 = vmatpush.msra.mxu0 0.0
  %1034 = vmatpush.msra.mxu0 0.0
  %1035 = vmatpush.msra.mxu0 0.0
  %1036 = vmatpush.msra.mxu0 0.0
  %1037 = vmatpush.msra.mxu0 0.0
  %1038 = vmatpush.msra.mxu0 0.0
  %1039 = vmatpush.msra.mxu0 0.0
  %1040 = vmatpush.msra.mxu0 0.0
  %1041 = vmatpush.msra.mxu0 0.0
  %1042 = vmatpush.msra.mxu0 0.0
  %1043 = vmatpush.msra.mxu0 0.0
  %1044 = vmatpush.msra.mxu0 0.0
  %1045 = vmatpush.msra.mxu0 0.0
  %1046 = vmatpush.msra.mxu0 %v959
  %1047 = vmatmul.f32.gmra.mxu0 %v969
  %v1048 = vpop.f32.mrf.mxu0
  %v1049 = vadd.f32 0.0, %v1048
  %1050 = vdwg.mxu0
  %1051 = vmatpush.msra.mxu0 0.0
  %1052 = vmatpush.msra.mxu0 0.0
  %1053 = vmatpush.msra.mxu0 0.0
  %1054 = vmatpush.msra.mxu0 0.0
  %1055 = vmatpush.msra.mxu0 0.0
  %1056 = vmatpush.msra.mxu0 0.0
  %1057 = vmatpush.msra.mxu0 0.0
  %1058 = vmatpush.msra.mxu0 0.0
  %1059 = vmatpush.msra.mxu0 0.0
  %1060 = vmatpush.msra.mxu0 0.0
  %1061 = vmatpush.msra.mxu0 0.0
  %1062 = vmatpush.msra.mxu0 0.0
  %1063 = vmatpush.msra.mxu0 0.0
  %1064 = vmatpush.msra.mxu0 0.0
  %1065 = vmatpush.msra.mxu0 0.0
  %1066 = vmatpush.msra.mxu0 %v960
  %1067 = vmatmul.f32.gmra.mxu0 %v969
  %v1068 = vpop.f32.mrf.mxu0
  %v1069 = vadd.f32 0.0, %v1068
  %1070 = vdwg.mxu0
  %1071 = vmatpush.msra.mxu0 0.0
  %1072 = vmatpush.msra.mxu0 0.0
  %1073 = vmatpush.msra.mxu0 0.0
  %1074 = vmatpush.msra.mxu0 0.0
  %1075 = vmatpush.msra.mxu0 0.0
  %1076 = vmatpush.msra.mxu0 0.0
  %1077 = vmatpush.msra.mxu0 0.0
  %1078 = vmatpush.msra.mxu0 0.0
  %1079 = vmatpush.msra.mxu0 0.0
  %1080 = vmatpush.msra.mxu0 0.0
  %1081 = vmatpush.msra.mxu0 0.0
  %1082 = vmatpush.msra.mxu0 0.0
  %1083 = vmatpush.msra.mxu0 0.0
  %1084 = vmatpush.msra.mxu0 0.0
  %1085 = vmatpush.msra.mxu0 0.0
  %1086 = vmatpush.msra.mxu0 %v961
  %1087 = vmatmul.f32.gmra.mxu0 %v969
  %v1088 = vpop.f32.mrf.mxu0
  %v1089 = vadd.f32 0.0, %v1088
  %1090 = vdwg.mxu0
  %v1091 = vadd.f32 %v933, %v989
  %v1092 = vadd.f32 %v934, %v1009
  %v1093 = vadd.f32 %v935, %v1029
  %v1094 = vadd.f32 %v936, %v1049
  %v1095 = vadd.f32 %v937, %v1069
  %v1096 = vadd.f32 %v938, %v1089
  %s1097 = scalar_lea.vmem %s1, 56
  %v1098 = vld [vmem:[%s1097] sm:$0xff]
  %1099 = vrot.lane.b32.xlu0 %v16, 91
  %v1100 = vpop.permute.xlu0 %1099
  %1101 = vrot.lane.b32.xlu0 %v17, 91
  %v1102 = vpop.permute.xlu0 %1101
  %1103 = vrot.lane.b32.xlu0 %v18, 91
  %v1104 = vpop.permute.xlu0 %1103
  %1105 = vrot.lane.b32.xlu0 %v19, 91
  %v1106 = vpop.permute.xlu0 %1105
  %1107 = vrot.lane.b32.xlu0 %v20, 91
  %v1108 = vpop.permute.xlu0 %1107
  %1109 = vrot.lane.b32.xlu0 %v21, 91
  %v1110 = vpop.permute.xlu0 %1109
  %1111 = vrot.lane.b32.xlu0 %v23, 91
  %v1112 = vpop.permute.xlu0 %1111
  %vm1113 = vcmask 744448
  %v1114 = vsel %vm1113, %v1100, %v1102
  %v1115 = vsel %vm1113, %v1102, %v1104
  %v1116 = vsel %vm1113, %v1104, %v1106
  %v1117 = vsel %vm1113, %v1106, %v1108
  %v1118 = vsel %vm1113, %v1108, %v1110
  %v1119 = vsel %vm1113, %v1110, %v1112
  %v1127 = vsel %vm60, %v1098, 0
  %1129 = vmatpush.msra.mxu0 0.0
  %1130 = vmatpush.msra.mxu0 0.0
  %1131 = vmatpush.msra.mxu0 0.0
  %1132 = vmatpush.msra.mxu0 0.0
  %1133 = vmatpush.msra.mxu0 0.0
  %1134 = vmatpush.msra.mxu0 0.0
  %1135 = vmatpush.msra.mxu0 0.0
  %1136 = vmatpush.msra.mxu0 0.0
  %1137 = vmatpush.msra.mxu0 0.0
  %1138 = vmatpush.msra.mxu0 0.0
  %1139 = vmatpush.msra.mxu0 0.0
  %1140 = vmatpush.msra.mxu0 0.0
  %1141 = vmatpush.msra.mxu0 0.0
  %1142 = vmatpush.msra.mxu0 0.0
  %1143 = vmatpush.msra.mxu0 0.0
  %1144 = vmatpush.msra.mxu0 %v1114
  %1145 = vmatmul.f32.gmra.mxu0 %v1127
  %v1146 = vpop.f32.mrf.mxu0
  %v1147 = vadd.f32 0.0, %v1146
  %1148 = vdwg.mxu0
  %1149 = vmatpush.msra.mxu0 0.0
  %1150 = vmatpush.msra.mxu0 0.0
  %1151 = vmatpush.msra.mxu0 0.0
  %1152 = vmatpush.msra.mxu0 0.0
  %1153 = vmatpush.msra.mxu0 0.0
  %1154 = vmatpush.msra.mxu0 0.0
  %1155 = vmatpush.msra.mxu0 0.0
  %1156 = vmatpush.msra.mxu0 0.0
  %1157 = vmatpush.msra.mxu0 0.0
  %1158 = vmatpush.msra.mxu0 0.0
  %1159 = vmatpush.msra.mxu0 0.0
  %1160 = vmatpush.msra.mxu0 0.0
  %1161 = vmatpush.msra.mxu0 0.0
  %1162 = vmatpush.msra.mxu0 0.0
  %1163 = vmatpush.msra.mxu0 0.0
  %1164 = vmatpush.msra.mxu0 %v1115
  %1165 = vmatmul.f32.gmra.mxu0 %v1127
  %v1166 = vpop.f32.mrf.mxu0
  %v1167 = vadd.f32 0.0, %v1166
  %1168 = vdwg.mxu0
  %1169 = vmatpush.msra.mxu0 0.0
  %1170 = vmatpush.msra.mxu0 0.0
  %1171 = vmatpush.msra.mxu0 0.0
  %1172 = vmatpush.msra.mxu0 0.0
  %1173 = vmatpush.msra.mxu0 0.0
  %1174 = vmatpush.msra.mxu0 0.0
  %1175 = vmatpush.msra.mxu0 0.0
  %1176 = vmatpush.msra.mxu0 0.0
  %1177 = vmatpush.msra.mxu0 0.0
  %1178 = vmatpush.msra.mxu0 0.0
  %1179 = vmatpush.msra.mxu0 0.0
  %1180 = vmatpush.msra.mxu0 0.0
  %1181 = vmatpush.msra.mxu0 0.0
  %1182 = vmatpush.msra.mxu0 0.0
  %1183 = vmatpush.msra.mxu0 0.0
  %1184 = vmatpush.msra.mxu0 %v1116
  %1185 = vmatmul.f32.gmra.mxu0 %v1127
  %v1186 = vpop.f32.mrf.mxu0
  %v1187 = vadd.f32 0.0, %v1186
  %1188 = vdwg.mxu0
  %1189 = vmatpush.msra.mxu0 0.0
  %1190 = vmatpush.msra.mxu0 0.0
  %1191 = vmatpush.msra.mxu0 0.0
  %1192 = vmatpush.msra.mxu0 0.0
  %1193 = vmatpush.msra.mxu0 0.0
  %1194 = vmatpush.msra.mxu0 0.0
  %1195 = vmatpush.msra.mxu0 0.0
  %1196 = vmatpush.msra.mxu0 0.0
  %1197 = vmatpush.msra.mxu0 0.0
  %1198 = vmatpush.msra.mxu0 0.0
  %1199 = vmatpush.msra.mxu0 0.0
  %1200 = vmatpush.msra.mxu0 0.0
  %1201 = vmatpush.msra.mxu0 0.0
  %1202 = vmatpush.msra.mxu0 0.0
  %1203 = vmatpush.msra.mxu0 0.0
  %1204 = vmatpush.msra.mxu0 %v1117
  %1205 = vmatmul.f32.gmra.mxu0 %v1127
  %v1206 = vpop.f32.mrf.mxu0
  %v1207 = vadd.f32 0.0, %v1206
  %1208 = vdwg.mxu0
  %1209 = vmatpush.msra.mxu0 0.0
  %1210 = vmatpush.msra.mxu0 0.0
  %1211 = vmatpush.msra.mxu0 0.0
  %1212 = vmatpush.msra.mxu0 0.0
  %1213 = vmatpush.msra.mxu0 0.0
  %1214 = vmatpush.msra.mxu0 0.0
  %1215 = vmatpush.msra.mxu0 0.0
  %1216 = vmatpush.msra.mxu0 0.0
  %1217 = vmatpush.msra.mxu0 0.0
  %1218 = vmatpush.msra.mxu0 0.0
  %1219 = vmatpush.msra.mxu0 0.0
  %1220 = vmatpush.msra.mxu0 0.0
  %1221 = vmatpush.msra.mxu0 0.0
  %1222 = vmatpush.msra.mxu0 0.0
  %1223 = vmatpush.msra.mxu0 0.0
  %1224 = vmatpush.msra.mxu0 %v1118
  %1225 = vmatmul.f32.gmra.mxu0 %v1127
  %v1226 = vpop.f32.mrf.mxu0
  %v1227 = vadd.f32 0.0, %v1226
  %1228 = vdwg.mxu0
  %1229 = vmatpush.msra.mxu0 0.0
  %1230 = vmatpush.msra.mxu0 0.0
  %1231 = vmatpush.msra.mxu0 0.0
  %1232 = vmatpush.msra.mxu0 0.0
  %1233 = vmatpush.msra.mxu0 0.0
  %1234 = vmatpush.msra.mxu0 0.0
  %1235 = vmatpush.msra.mxu0 0.0
  %1236 = vmatpush.msra.mxu0 0.0
  %1237 = vmatpush.msra.mxu0 0.0
  %1238 = vmatpush.msra.mxu0 0.0
  %1239 = vmatpush.msra.mxu0 0.0
  %1240 = vmatpush.msra.mxu0 0.0
  %1241 = vmatpush.msra.mxu0 0.0
  %1242 = vmatpush.msra.mxu0 0.0
  %1243 = vmatpush.msra.mxu0 0.0
  %1244 = vmatpush.msra.mxu0 %v1119
  %1245 = vmatmul.f32.gmra.mxu0 %v1127
  %v1246 = vpop.f32.mrf.mxu0
  %v1247 = vadd.f32 0.0, %v1246
  %1248 = vdwg.mxu0
  %v1249 = vadd.f32 %v1091, %v1147
  %v1250 = vadd.f32 %v1092, %v1167
  %v1251 = vadd.f32 %v1093, %v1187
  %v1252 = vadd.f32 %v1094, %v1207
  %v1253 = vadd.f32 %v1095, %v1227
  %v1254 = vadd.f32 %v1096, %v1247
  %s1255 = scalar_lea.vmem %s1, 64
  %v1256 = vld [vmem:[%s1255] sm:$0xff]
  %1257 = vrot.lane.b32.xlu0 %v16, 90
  %v1258 = vpop.permute.xlu0 %1257
  %1259 = vrot.lane.b32.xlu0 %v17, 90
  %v1260 = vpop.permute.xlu0 %1259
  %1261 = vrot.lane.b32.xlu0 %v18, 90
  %v1262 = vpop.permute.xlu0 %1261
  %1263 = vrot.lane.b32.xlu0 %v19, 90
  %v1264 = vpop.permute.xlu0 %1263
  %1265 = vrot.lane.b32.xlu0 %v20, 90
  %v1266 = vpop.permute.xlu0 %1265
  %1267 = vrot.lane.b32.xlu0 %v21, 90
  %v1268 = vpop.permute.xlu0 %1267
  %1269 = vrot.lane.b32.xlu0 %v23, 90
  %v1270 = vpop.permute.xlu0 %1269
  %vm1271 = vcmask 736256
  %v1272 = vsel %vm1271, %v1258, %v1260
  %v1273 = vsel %vm1271, %v1260, %v1262
  %v1274 = vsel %vm1271, %v1262, %v1264
  %v1275 = vsel %vm1271, %v1264, %v1266
  %v1276 = vsel %vm1271, %v1266, %v1268
  %v1277 = vsel %vm1271, %v1268, %v1270
  %v1285 = vsel %vm60, %v1256, 0
  %1287 = vmatpush.msra.mxu0 0.0
  %1288 = vmatpush.msra.mxu0 0.0
  %1289 = vmatpush.msra.mxu0 0.0
  %1290 = vmatpush.msra.mxu0 0.0
  %1291 = vmatpush.msra.mxu0 0.0
  %1292 = vmatpush.msra.mxu0 0.0
  %1293 = vmatpush.msra.mxu0 0.0
  %1294 = vmatpush.msra.mxu0 0.0
  %1295 = vmatpush.msra.mxu0 0.0
  %1296 = vmatpush.msra.mxu0 0.0
  %1297 = vmatpush.msra.mxu0 0.0
  %1298 = vmatpush.msra.mxu0 0.0
  %1299 = vmatpush.msra.mxu0 0.0
  %1300 = vmatpush.msra.mxu0 0.0
  %1301 = vmatpush.msra.mxu0 0.0
  %1302 = vmatpush.msra.mxu0 %v1272
  %1303 = vmatmul.f32.gmra.mxu0 %v1285
  %v1304 = vpop.f32.mrf.mxu0
  %v1305 = vadd.f32 0.0, %v1304
  %1306 = vdwg.mxu0
  %1307 = vmatpush.msra.mxu0 0.0
  %1308 = vmatpush.msra.mxu0 0.0
  %1309 = vmatpush.msra.mxu0 0.0
  %1310 = vmatpush.msra.mxu0 0.0
  %1311 = vmatpush.msra.mxu0 0.0
  %1312 = vmatpush.msra.mxu0 0.0
  %1313 = vmatpush.msra.mxu0 0.0
  %1314 = vmatpush.msra.mxu0 0.0
  %1315 = vmatpush.msra.mxu0 0.0
  %1316 = vmatpush.msra.mxu0 0.0
  %1317 = vmatpush.msra.mxu0 0.0
  %1318 = vmatpush.msra.mxu0 0.0
  %1319 = vmatpush.msra.mxu0 0.0
  %1320 = vmatpush.msra.mxu0 0.0
  %1321 = vmatpush.msra.mxu0 0.0
  %1322 = vmatpush.msra.mxu0 %v1273
  %1323 = vmatmul.f32.gmra.mxu0 %v1285
  %v1324 = vpop.f32.mrf.mxu0
  %v1325 = vadd.f32 0.0, %v1324
  %1326 = vdwg.mxu0
  %1327 = vmatpush.msra.mxu0 0.0
  %1328 = vmatpush.msra.mxu0 0.0
  %1329 = vmatpush.msra.mxu0 0.0
  %1330 = vmatpush.msra.mxu0 0.0
  %1331 = vmatpush.msra.mxu0 0.0
  %1332 = vmatpush.msra.mxu0 0.0
  %1333 = vmatpush.msra.mxu0 0.0
  %1334 = vmatpush.msra.mxu0 0.0
  %1335 = vmatpush.msra.mxu0 0.0
  %1336 = vmatpush.msra.mxu0 0.0
  %1337 = vmatpush.msra.mxu0 0.0
  %1338 = vmatpush.msra.mxu0 0.0
  %1339 = vmatpush.msra.mxu0 0.0
  %1340 = vmatpush.msra.mxu0 0.0
  %1341 = vmatpush.msra.mxu0 0.0
  %1342 = vmatpush.msra.mxu0 %v1274
  %1343 = vmatmul.f32.gmra.mxu0 %v1285
  %v1344 = vpop.f32.mrf.mxu0
  %v1345 = vadd.f32 0.0, %v1344
  %1346 = vdwg.mxu0
  %1347 = vmatpush.msra.mxu0 0.0
  %1348 = vmatpush.msra.mxu0 0.0
  %1349 = vmatpush.msra.mxu0 0.0
  %1350 = vmatpush.msra.mxu0 0.0
  %1351 = vmatpush.msra.mxu0 0.0
  %1352 = vmatpush.msra.mxu0 0.0
  %1353 = vmatpush.msra.mxu0 0.0
  %1354 = vmatpush.msra.mxu0 0.0
  %1355 = vmatpush.msra.mxu0 0.0
  %1356 = vmatpush.msra.mxu0 0.0
  %1357 = vmatpush.msra.mxu0 0.0
  %1358 = vmatpush.msra.mxu0 0.0
  %1359 = vmatpush.msra.mxu0 0.0
  %1360 = vmatpush.msra.mxu0 0.0
  %1361 = vmatpush.msra.mxu0 0.0
  %1362 = vmatpush.msra.mxu0 %v1275
  %1363 = vmatmul.f32.gmra.mxu0 %v1285
  %v1364 = vpop.f32.mrf.mxu0
  %v1365 = vadd.f32 0.0, %v1364
  %1366 = vdwg.mxu0
  %1367 = vmatpush.msra.mxu0 0.0
  %1368 = vmatpush.msra.mxu0 0.0
  %1369 = vmatpush.msra.mxu0 0.0
  %1370 = vmatpush.msra.mxu0 0.0
  %1371 = vmatpush.msra.mxu0 0.0
  %1372 = vmatpush.msra.mxu0 0.0
  %1373 = vmatpush.msra.mxu0 0.0
  %1374 = vmatpush.msra.mxu0 0.0
  %1375 = vmatpush.msra.mxu0 0.0
  %1376 = vmatpush.msra.mxu0 0.0
  %1377 = vmatpush.msra.mxu0 0.0
  %1378 = vmatpush.msra.mxu0 0.0
  %1379 = vmatpush.msra.mxu0 0.0
  %1380 = vmatpush.msra.mxu0 0.0
  %1381 = vmatpush.msra.mxu0 0.0
  %1382 = vmatpush.msra.mxu0 %v1276
  %1383 = vmatmul.f32.gmra.mxu0 %v1285
  %v1384 = vpop.f32.mrf.mxu0
  %v1385 = vadd.f32 0.0, %v1384
  %1386 = vdwg.mxu0
  %1387 = vmatpush.msra.mxu0 0.0
  %1388 = vmatpush.msra.mxu0 0.0
  %1389 = vmatpush.msra.mxu0 0.0
  %1390 = vmatpush.msra.mxu0 0.0
  %1391 = vmatpush.msra.mxu0 0.0
  %1392 = vmatpush.msra.mxu0 0.0
  %1393 = vmatpush.msra.mxu0 0.0
  %1394 = vmatpush.msra.mxu0 0.0
  %1395 = vmatpush.msra.mxu0 0.0
  %1396 = vmatpush.msra.mxu0 0.0
  %1397 = vmatpush.msra.mxu0 0.0
  %1398 = vmatpush.msra.mxu0 0.0
  %1399 = vmatpush.msra.mxu0 0.0
  %1400 = vmatpush.msra.mxu0 0.0
  %1401 = vmatpush.msra.mxu0 0.0
  %1402 = vmatpush.msra.mxu0 %v1277
  %1403 = vmatmul.f32.gmra.mxu0 %v1285
  %v1404 = vpop.f32.mrf.mxu0
  %v1405 = vadd.f32 0.0, %v1404
  %1406 = vdwg.mxu0
  %v1407 = vadd.f32 %v1249, %v1305
  %v1408 = vadd.f32 %v1250, %v1325
  %v1409 = vadd.f32 %v1251, %v1345
  %v1410 = vadd.f32 %v1252, %v1365
  %v1411 = vadd.f32 %v1253, %v1385
  %v1412 = vadd.f32 %v1254, %v1405
  %v1413 = vld [vmem:[%s2] sm:$0xff]
  %1415 = vset.pattern.permute.xlu0 0
  %1416 = vperm.xlu0 %1415, %v1413
  %v1417 = vpop.permute.xlu0 %1416
  %v1419 = vadd.f32 %v1407, %v1417
  %v1420 = vadd.f32 %v1408, %v1417
  %v1421 = vadd.f32 %v1409, %v1417
  %v1422 = vadd.f32 %v1410, %v1417
  %v1423 = vadd.f32 %v1411, %v1417
  %v1424 = vadd.f32 %v1412, %v1417
  %1425 = vst [vmem:[%s3] sm:$0xff] %v1419
  %1426 = vst [vmem:[%s3 + $0x8] sm:$0xff] %v1420
  %1427 = vst [vmem:[%s3 + $0x10] sm:$0xff] %v1421
  %1428 = vst [vmem:[%s3 + $0x18] sm:$0xff] %v1422
  %1429 = vst [vmem:[%s3 + $0x20] sm:$0xff] %v1423
  %1430 = vst [vmem:[%s3 + $0x28] sm:$0xff] %v1424
  %v1431 = vld [vmem:[%s2] sm:$0xff]
  %v1432 = vsub.f32 1.0, %v1431
  %1434 = vset.pattern.permute.xlu0 1
  %1435 = vperm.xlu0 %1434, %v1432
  %v1436 = vpop.permute.xlu0 %1435
  %v1438 = vmul.f32 %v1419, %v1436
  %v1439 = vmul.f32 %v1420, %v1436
  %v1440 = vmul.f32 %v1421, %v1436
  %v1441 = vmul.f32 %v1422, %v1436
  %v1442 = vmul.f32 %v1423, %v1436
  %v1443 = vmul.f32 %v1424, %v1436
  %1445 = vrot.lane.b32.xlu0 %v1431, 1
  %v1446 = vpop.permute.xlu0 %1445
  %v1448 = vmul.f32 %v1431, %v1446
  %1450 = vset.pattern.permute.xlu0 2
  %1451 = vperm.xlu0 %1450, %v1448
  %v1452 = vpop.permute.xlu0 %1451
  %v1454 = vadd.f32 %v1438, %v1452
  %v1455 = vadd.f32 %v1439, %v1452
  %v1456 = vadd.f32 %v1440, %v1452
  %v1457 = vadd.f32 %v1441, %v1452
  %v1458 = vadd.f32 %v1442, %v1452
  %v1459 = vadd.f32 %v1443, %v1452
  %1460 = vset.pattern.permute.xlu0 3
  %1461 = vperm.xlu0 %1460, %v1431
  %v1462 = vpop.permute.xlu0 %1461
  %v1464 = vadd.f32 %v1454, %v1462
  %v1465 = vadd.f32 %v1455, %v1462
  %v1466 = vadd.f32 %v1456, %v1462
  %v1467 = vadd.f32 %v1457, %v1462
  %v1468 = vadd.f32 %v1458, %v1462
  %v1469 = vadd.f32 %v1459, %v1462
  %1470 = vst [vmem:[%s4] sm:$0xff] %v1464
  %1471 = vst [vmem:[%s4 + $0x8] sm:$0xff] %v1465
  %1472 = vst [vmem:[%s4 + $0x10] sm:$0xff] %v1466
  %1473 = vst [vmem:[%s4 + $0x18] sm:$0xff] %v1467
  %1474 = vst [vmem:[%s4 + $0x20] sm:$0xff] %v1468
  %1475 = vst [vmem:[%s4 + $0x28] sm:$0xff] %v1469
  // Predicated region
  $region14: #{instrumented_conv_forward.1} parent=0 // pred_check
    _
  $region15: #{instrumented_conv_forward.1} parent=0 // pred_check_branch
    %1477 = sbr.rel (0) target = $region17
  $region16: #{instrumented_conv_forward.1} parent=0 // pred_region
    _
  $region17: #{instrumented_conv_forward.1} parent=0 // pred_fallthru
    _
  // Predicated region
  $region18: #{instrumented_conv_forward.1} parent=0 // pred_check
    _
  $region19: #{instrumented_conv_forward.1} parent=0 // pred_check_branch
    %1479 = sbr.rel (0) target = $region21
  $region20: #{instrumented_conv_forward.1} parent=0 // pred_region
    _
  $region21: #{instrumented_conv_forward.1} parent=0 // pred_fallthru
    _
  // Predicated region
  $region22: #{instrumented_conv_forward.1} parent=0 // pred_check
    _
  $region23: #{instrumented_conv_forward.1} parent=0 // pred_check_branch
    %1481 = sbr.rel (0) target = $region25
  $region24: #{instrumented_conv_forward.1} parent=0 // pred_region
    _
  $region25: #{instrumented_conv_forward.1} parent=0 // pred_fallthru
    _
  // Predicated region
  $region26: #{instrumented_conv_forward.1} parent=0 // pred_check
    _
  $region27: #{instrumented_conv_forward.1} parent=0 // pred_check_branch
    %1483 = sbr.rel (0) target = $region29
  $region28: #{instrumented_conv_forward.1} parent=0 // pred_region
    _
  $region29: #{instrumented_conv_forward.1} parent=0 // pred_fallthru
    _

</llo_original>
